<compile_context>
chip_gen: v7x
topology: tpu7x:2x2x1
jax: 0.10.0
libtpu: 0.0.40
codegen_flags: <defaults>
</compile_context>

<pallas_src>
import functools
import math

import jax
import jax.numpy as jnp
from jax import lax
from jax.experimental import pallas as pl
from jax.experimental.pallas import tpu as pltpu

NEG_BIG = -1e30  # finite "minus infinity" for the key-padding bias


# ---------------------------------------------------------------------------
# Per-chip VMEM sizing (derived from hardware info, not a fixed constant).
# ---------------------------------------------------------------------------
def _vmem_capacity_and_limit():
    cap = None
    try:
        info = pltpu.get_tpu_info()
        for name in ("vmem_capacity_bytes", "vmem_size_bytes", "vmem_bytes"):
            val = getattr(info, name, None)
            if val:
                cap = int(val)
                break
    except Exception:
        cap = None
    if not cap:
        cap = 64 * 1024 * 1024  # conservative fallback: v7x physical VMEM / TC
    # Scoped limit: 3/4 of physical (96 MiB on 128-MiB v5e/v6e, 48 MiB on v7x).
    return cap, min(cap * 3 // 4, 100 * 1024 * 1024)


# ---------------------------------------------------------------------------
# pipeline_mode=pl.Buffered(n) support probe.  Constant-index blocks (weights,
# resident K/V) do not need double buffers; single-buffering frees VMEM.
# The probe actually compiles + runs a tiny kernel so an unsupported feature
# degrades gracefully instead of breaking the real kernels.
# ---------------------------------------------------------------------------
def _probe_kernel(x_ref, o_ref):
    o_ref[...] = x_ref[...] + 1.0


@functools.lru_cache(maxsize=None)
def _buffered_supported():
    try:
        out = pl.pallas_call(
            _probe_kernel,
            out_shape=jax.ShapeDtypeStruct((8, 128), jnp.float32),
            grid=(1,),
            in_specs=[pl.BlockSpec((8, 128), lambda i: (0, 0),
                                   pipeline_mode=pl.Buffered(1))],
            out_specs=pl.BlockSpec((8, 128), lambda i: (0, 0)),
        )(jnp.zeros((8, 128), jnp.float32))
        return bool(jnp.all(jax.block_until_ready(out) == 1.0))
    except Exception:
        return False


def _spec(block_shape, index_map, *, buffers=None):
    """BlockSpec helper; applies pipeline_mode=pl.Buffered(buffers) if usable."""
    if buffers is not None and _buffered_supported():
        return pl.BlockSpec(block_shape, index_map,
                            pipeline_mode=pl.Buffered(buffers))
    return pl.BlockSpec(block_shape, index_map)


# ---------------------------------------------------------------------------
# Pass 1: Q (pre-scaled by 0.06), K, V projections — each computed ONCE.
# ---------------------------------------------------------------------------
def _qkv_proj_kernel(x_ref, wq_ref, wk_ref, wv_ref, q_out, k_out, v_out):
    x = x_ref[...]                                        # (bp, D_in) bf16
    q = jnp.dot(x, wq_ref[...], preferred_element_type=jnp.float32) * 0.06
    q_out[...] = q.astype(q_out.dtype)
    k_out[...] = jnp.dot(
        x, wk_ref[...], preferred_element_type=jnp.float32).astype(k_out.dtype)
    v_out[...] = jnp.dot(
        x, wv_ref[...], preferred_element_type=jnp.float32).astype(v_out.dtype)


# ---------------------------------------------------------------------------
# Pass 2: flash attention (online softmax) + fused output projection.
# grid = (num_q_tiles, num_kv_tiles); the kv axis is a sequential reduction.
# ---------------------------------------------------------------------------
def _flash_attn_kernel(*refs, block_k, num_kv, kv_resident, has_bias):
    if has_bias:
        (q_ref, k_ref, v_ref, bias_ref, wo_ref, o_ref,
         m_scr, l_scr, acc_scr) = refs
    else:
        (q_ref, k_ref, v_ref, wo_ref, o_ref,
         m_scr, l_scr, acc_scr) = refs
        bias_ref = None

    kv = pl.program_id(1)

    @pl.when(kv == 0)
    def _init():
        # Finite NEG_BIG (not -inf) avoids inf-inf NaNs.  A fully-masked kv
        # tile cannot occur: padding is < block_k and confined to the last
        # tile by construction.
        m_scr[...] = jnp.full_like(m_scr, NEG_BIG)
        l_scr[...] = jnp.zeros_like(l_scr)
        acc_scr[...] = jnp.zeros_like(acc_scr)

    if kv_resident:
        start = pl.multiple_of(kv * block_k, block_k)
        k_blk = k_ref[pl.ds(start, block_k), :]           # slice resident K
        v_blk = v_ref[pl.ds(start, block_k), :]           # slice resident V
    else:
        k_blk = k_ref[...]
        v_blk = v_ref[...]

    # S = Q K^T: contract the feature dims directly so the MXU consumes K in
    # its stored layout (no explicit .T / XLU relayout every kv step).
    s = lax.dot_general(q_ref[...], k_blk,
                        dimension_numbers=(((1,), (1,)), ((), ())),
                        preferred_element_type=jnp.float32)   # (bq, bk) f32

    if has_bias:
        if kv_resident:
            start = pl.multiple_of(kv * block_k, block_k)
            bias = bias_ref[:, pl.ds(start, block_k)]
        else:
            bias = bias_ref[...]
        s = s + bias                                      # (bq,bk) + (1,bk)

    # Online softmax with lane-replicated (bq, 128) running stats.
    m_prev = m_scr[...]
    m_new = jnp.maximum(m_prev, jnp.max(s, axis=-1, keepdims=True))
    alpha = jnp.exp(m_prev - m_new)
    m_scr[...] = m_new
    # Cast p to bf16 right after the exp: the PV matmul and the row-sum both
    # consume the bf16 values (half the vregs of an f32 tile; the denominator
    # stays consistent with the numerator).
    p = jnp.exp(s - m_new[:, :1]).astype(jnp.bfloat16)
    l_scr[...] = alpha * l_scr[...] + jnp.sum(
        p.astype(jnp.float32), axis=-1, keepdims=True)
    acc_scr[...] = alpha[:, :1] * acc_scr[...] + jnp.dot(
        p, v_blk, preferred_element_type=jnp.float32)

    @pl.when(kv == num_kv - 1)
    def _finalize():
        inv_l = pl.reciprocal(l_scr[...], approx=True)    # EUP slot, ~free
        y = acc_scr[...] * inv_l[:, :1]
        # Fused output projection y @ Wo.
        o_ref[...] = jnp.dot(y.astype(wo_ref.dtype), wo_ref[...],
                             preferred_element_type=jnp.float32
                             ).astype(o_ref.dtype)


# ---------------------------------------------------------------------------
# Wrapper
# ---------------------------------------------------------------------------
def self_attention_forward(x, wk, wq, wv, wo, *,
                           block_q=256, block_k=256, kv_resident=None):
    """Forward pass of the PyTorch SelfAttention module (eval mode).

    x: (N, D_in) f32.  Weights pre-transposed to (in, out): wk/wq/wv are
    (D_in, D_out), wo is (D_out, D_in).  kv_resident: None = auto
    (fit-to-VMEM check), True/False = force.  Returns (N, D_in) f32.
    """
    N, D_in = x.shape
    D_out = wq.shape[1]
    assert wk.shape == (D_in, D_out) and wv.shape == (D_in, D_out)
    assert wq.shape == (D_in, D_out) and wo.shape == (D_out, D_in)
    assert D_in % 128 == 0 and D_out % 128 == 0, "feature dims must be multiples of 128"
    assert block_q % 128 == 0 and block_k % 128 == 0

    step = block_q * block_k // math.gcd(block_q, block_k)   # lcm
    n_pad = pl.cdiv(N, step) * step
    need_mask = n_pad != N
    num_q, num_kv = n_pad // block_q, n_pad // block_k

    _, vmem_limit = _vmem_capacity_and_limit()

    xb = x.astype(jnp.bfloat16)
    if need_mask:
        xb = jnp.pad(xb, ((0, n_pad - N), (0, 0)))
    wq_b, wk_b, wv_b, wo_b = (w.astype(jnp.bfloat16) for w in (wq, wk, wv, wo))

    # ---- pass 1: Q / K / V projections (row tile >= 256 when it divides) ----
    block_p = next(c for c in (512, 256, block_q, 128) if n_pad % c == 0)
    q_all, k_all, v_all = pl.pallas_call(
        _qkv_proj_kernel,
        out_shape=tuple(jax.ShapeDtypeStruct((n_pad, D_out), jnp.bfloat16)
                        for _ in range(3)),
        grid=(n_pad // block_p,),
        in_specs=[
            pl.BlockSpec((block_p, D_in), lambda i: (i, 0)),       # x rows
            _spec((D_in, D_out), lambda i: (0, 0), buffers=1),     # Wq
            _spec((D_in, D_out), lambda i: (0, 0), buffers=1),     # Wk
            _spec((D_in, D_out), lambda i: (0, 0), buffers=1),     # Wv
        ],
        out_specs=tuple(pl.BlockSpec((block_p, D_out), lambda i: (i, 0))
                        for _ in range(3)),
        compiler_params=pltpu.CompilerParams(
            dimension_semantics=("parallel",),
            vmem_limit_bytes=vmem_limit),
    )(xb, wq_b, wk_b, wv_b)

    # ---- pass-2 VMEM budgeting ----
    BF, F32 = 2, 4
    single_ok = _buffered_supported()
    w_buf = 1 if single_ok else 2
    fixed_bytes = (2 * block_q * D_out * BF        # Q tile (double buffered)
                   + w_buf * D_out * D_in * BF     # Wo (resident)
                   + 2 * block_q * D_in * F32      # output tile
                   + 2 * block_q * 128 * F32       # m, l stats
                   + block_q * D_out * F32)        # accumulator
    kv_res_buf = 1 if single_ok else 2
    resident_bytes = (fixed_bytes
                      + kv_res_buf * 2 * n_pad * D_out * BF
                      + (kv_res_buf * n_pad * F32 if need_mask else 0))
    if kv_resident is None:
        kv_resident = resident_bytes <= int(0.9 * vmem_limit)

    # ---- pass-2 specs / args ----
    in_specs = [pl.BlockSpec((block_q, D_out), lambda i, j: (i, 0))]   # Q tile
    args = [q_all]
    if kv_resident:
        # K/V fetched from HBM exactly once (constant index_map, single
        # buffered) and sliced per kv step inside the kernel.
        in_specs += [_spec((n_pad, D_out), lambda i, j: (0, 0), buffers=1),
                     _spec((n_pad, D_out), lambda i, j: (0, 0), buffers=1)]
    else:
        # Streaming fallback: deeper (3-buffer) pipelining when VMEM allows.
        stream3 = (fixed_bytes + 3 * 2 * block_k * D_out * BF
                   + (2 * block_k * F32 if need_mask else 0))
        kv_buf = 3 if (single_ok and stream3 <= int(0.9 * vmem_limit)) else None
        in_specs += [_spec((block_k, D_out), lambda i, j: (j, 0), buffers=kv_buf),
                     _spec((block_k, D_out), lambda i, j: (j, 0), buffers=kv_buf)]
    args += [k_all, v_all]

    if need_mask:
        # Additive key-padding bias (0 for valid keys, NEG_BIG for padded
        # keys); replaces the old per-step iota/compare/select and costs
        # nothing when the block size divides N.
        key_bias = jnp.where(jnp.arange(n_pad) < N, 0.0, NEG_BIG
                             ).astype(jnp.float32).reshape(1, n_pad)
        if kv_resident:
            in_specs.append(_spec((1, n_pad), lambda i, j: (0, 0), buffers=1))
        else:
            in_specs.append(pl.BlockSpec((1, block_k), lambda i, j: (0, j)))
        args.append(key_bias)

    in_specs.append(_spec((D_out, D_in), lambda i, j: (0, 0), buffers=1))  # Wo
    args.append(wo_b)

    kernel = functools.partial(
        _flash_attn_kernel, block_k=block_k, num_kv=num_kv,
        kv_resident=kv_resident, has_bias=need_mask)

    # TODO(synk): emit bf16 output (halves HBM writeback) if the consumer
    # tolerates it; kept f32 here for parity with the PyTorch module.
    y = pl.pallas_call(
        kernel,
        out_shape=jax.ShapeDtypeStruct((n_pad, D_in), jnp.float32),
        grid=(num_q, num_kv),
        in_specs=in_specs,
        out_specs=pl.BlockSpec((block_q, D_in), lambda i, j: (i, 0)),
        scratch_shapes=[
            pltpu.VMEM((block_q, 128), jnp.float32),   # running max m (lane-replicated)
            pltpu.VMEM((block_q, 128), jnp.float32),   # running denom l
            pltpu.VMEM((block_q, D_out), jnp.float32), # output accumulator
        ],
        compiler_params=pltpu.CompilerParams(
            dimension_semantics=("parallel", "arbitrary"),
            vmem_limit_bytes=vmem_limit),
    )(*args)

    return y[:N] if need_mask else y


# ---------------------------------------------------------------------------
# Pure-JAX reference mirroring the PyTorch forward (eval mode: Dropout(0.5)
# is an identity) at the same bf16-operand / f32-accumulate precision.
# ---------------------------------------------------------------------------
def reference_forward(x, wk, wq, wv, wo):
    bf, f32 = jnp.bfloat16, jnp.float32
    xb = x.astype(bf)
    K = jnp.dot(xb, wk.astype(bf), preferred_element_type=f32).astype(bf)
    V = jnp.dot(xb, wv.astype(bf), preferred_element_type=f32).astype(bf)
    Q = (jnp.dot(xb, wq.astype(bf), preferred_element_type=f32) * 0.06).astype(bf)
    logits = jnp.dot(Q, K.T, preferred_element_type=f32)
    attn = jax.nn.softmax(logits, axis=-1)          # drop50: identity in eval
    y = jnp.dot(attn.astype(bf), V, preferred_element_type=f32)
    out = jnp.dot(y.astype(bf), wo.astype(bf), preferred_element_type=f32)
    return out


if __name__ == "__main__":
    key = jax.random.PRNGKey(0)

    def make_inputs(N, D_in, D_out, k):
        ks = jax.random.split(k, 5)
        scale = 0.05
        x = jax.random.normal(ks[0], (N, D_in), jnp.float32)
        wk = jax.random.normal(ks[1], (D_in, D_out), jnp.float32) * scale
        wq = jax.random.normal(ks[2], (D_in, D_out), jnp.float32) * scale
        wv = jax.random.normal(ks[3], (D_in, D_out), jnp.float32) * scale
        wo = jax.random.normal(ks[4], (D_out, D_in), jnp.float32) * scale
        return x, wk, wq, wv, wo

    # Small shapes consistent with the module (real module uses 1024x1024).
    # Covers: resident K/V (auto + forced), streaming fallback, key-padding
    # bias, and decoupled block_q / block_k.
    configs = [
        dict(N=384, D_in=256, D_out=256, block_q=128, block_k=128, kv_resident=None),
        dict(N=384, D_in=256, D_out=256, block_q=128, block_k=128, kv_resident=False),
        dict(N=200, D_in=256, D_out=256, block_q=256, block_k=128, kv_resident=True),
        dict(N=200, D_in=256, D_out=256, block_q=128, block_k=128, kv_resident=False),
    ]

    for idx, cfg in enumerate(configs):
        x, wk, wq, wv, wo = make_inputs(cfg["N"], cfg["D_in"], cfg["D_out"],
                                        jax.random.fold_in(key, idx))
        out = self_attention_forward(
            x, wk, wq, wv, wo,
            block_q=cfg["block_q"], block_k=cfg["block_k"],
            kv_resident=cfg["kv_resident"])
        out = jax.block_until_ready(out)

        ref = reference_forward(x, wk, wq, wv, wo)
        assert out.shape == ref.shape == (cfg["N"], cfg["D_in"])
        max_err = float(jnp.max(jnp.abs(out - ref)))
        assert jnp.allclose(out, ref, atol=1e-2, rtol=5e-2), (
            f"config {idx} mismatch vs reference (max abs err {max_err})")

    print("KERNEL_OK")
</pallas_src>

<mosaic_0001>
module attributes {stable_mosaic.version = 11 : i64} {
  func.func @_probe_kernel(%arg0: i32, %arg1: memref<8x128xf32, #tpu.memory_space<vmem>>, %arg2: memref<8x128xf32, #tpu.memory_space<vmem>>) attributes {dimension_semantics = [#tpu.dimension_semantics<arbitrary>], iteration_bounds = array<i64: 1>, scalar_prefetch = 0 : i64, scratch_operands = 0 : i64, tpu.core_type = #tpu.core_type<tc>, window_params = [{pipeline_mode = #tpu.pipeline_mode<synchronous>, transform_indices = @transform_0, window_bounds = array<i64: 8, 128>}, {pipeline_mode = #tpu.pipeline_mode<synchronous>, transform_indices = @transform_1, window_bounds = array<i64: 8, 128>}]} {
    %c0 = arith.constant 0 : index
    %c0_0 = arith.constant 0 : index
    %0 = vector.load %arg1[%c0, %c0_0] : memref<8x128xf32, #tpu.memory_space<vmem>>, vector<8x128xf32>
    %cst = arith.constant 1.000000e+00 : f32
    %1 = vector.broadcast %cst : f32 to vector<8x128xf32>
    %2 = arith.addf %0, %1 : vector<8x128xf32>
    %c0_1 = arith.constant 0 : index
    %c0_2 = arith.constant 0 : index
    %3 = vector.load %arg2[%c0_1, %c0_2] : memref<8x128xf32, #tpu.memory_space<vmem>>, vector<8x128xf32>
    tpu.vector_store %arg2[%c0_1, %c0_2], %2 {strides = array<i32>} : memref<8x128xf32, #tpu.memory_space<vmem>>, vector<8x128xf32>,
    return
  }
  func.func @transform_0(%arg0: i32) -> (i32, i32) {
    %c0_i32 = arith.constant 0 : i32
    %c0_i32_0 = arith.constant 0 : i32
    %c0_i32_1 = arith.constant 0 : i32
    return %c0_i32, %c0_i32_0 : i32, i32
  }
  func.func @transform_1(%arg0: i32) -> (i32, i32) {
    %c0_i32 = arith.constant 0 : i32
    %c0_i32_0 = arith.constant 0 : i32
    %c0_i32_1 = arith.constant 0 : i32
    return %c0_i32, %c0_i32_0 : i32, i32
  }
}

module attributes {stable_mosaic.version = 11 : i64} {
  func.func @_qkv_proj_kernel(%arg0: i32, %arg1: memref<128x256xbf16, #tpu.memory_space<vmem>>, %arg2: memref<256x256xbf16, #tpu.memory_space<vmem>>, %arg3: memref<256x256xbf16, #tpu.memory_space<vmem>>, %arg4: memref<256x256xbf16, #tpu.memory_space<vmem>>, %arg5: memref<128x256xbf16, #tpu.memory_space<vmem>>, %arg6: memref<128x256xbf16, #tpu.memory_space<vmem>>, %arg7: memref<128x256xbf16, #tpu.memory_space<vmem>>) attributes {dimension_semantics = [#tpu.dimension_semantics<parallel>], iteration_bounds = array<i64: 3>, scalar_prefetch = 0 : i64, scratch_operands = 0 : i64, tpu.core_type = #tpu.core_type<tc>, window_params = [{transform_indices = @transform_0, window_bounds = array<i64: 128, 256>}, {pipeline_mode = #tpu.pipeline_mode<synchronous>, transform_indices = @transform_1, window_bounds = array<i64: 256, 256>}, {pipeline_mode = #tpu.pipeline_mode<synchronous>, transform_indices = @transform_2, window_bounds = array<i64: 256, 256>}, {pipeline_mode = #tpu.pipeline_mode<synchronous>, transform_indices = @transform_3, window_bounds = array<i64: 256, 256>}, {transform_indices = @transform_4, window_bounds = array<i64: 128, 256>}, {transform_indices = @transform_5, window_bounds = array<i64: 128, 256>}, {transform_indices = @transform_6, window_bounds = array<i64: 128, 256>}]} {
    %c0 = arith.constant 0 : index
    %c0_0 = arith.constant 0 : index
    %0 = vector.load %arg1[%c0, %c0_0] : memref<128x256xbf16, #tpu.memory_space<vmem>>, vector<128x256xbf16>
    %c0_1 = arith.constant 0 : index
    %c0_2 = arith.constant 0 : index
    %1 = vector.load %arg2[%c0_1, %c0_2] : memref<256x256xbf16, #tpu.memory_space<vmem>>, vector<256x256xbf16>
    %cst = arith.constant dense<0.000000e+00> : vector<128x256xf32>
    %2 = tpu.matmul %0, %1, %cst {dimension_numbers = #tpu.dot_dimension_numbers<[1], [0], [0], [1], [0, 0, 1, 1], [], []>} : vector<128x256xbf16>, vector<256x256xbf16>, vector<128x256xf32> -> vector<128x256xf32>
    %cst_3 = arith.constant 6.000000e-02 : f32
    %3 = vector.broadcast %cst_3 : f32 to vector<128x256xf32>
    %4 = arith.mulf %2, %3 : vector<128x256xf32>
    %5 = arith.truncf %4 : vector<128x256xf32> to vector<128x256xbf16>
    %c0_4 = arith.constant 0 : index
    %c0_5 = arith.constant 0 : index
    %6 = vector.load %arg5[%c0_4, %c0_5] : memref<128x256xbf16, #tpu.memory_space<vmem>>, vector<128x256xbf16>
    tpu.vector_store %arg5[%c0_4, %c0_5], %5 {strides = array<i32>} : memref<128x256xbf16, #tpu.memory_space<vmem>>, vector<128x256xbf16>,
    %c0_6 = arith.constant 0 : index
    %c0_7 = arith.constant 0 : index
    %7 = vector.load %arg3[%c0_6, %c0_7] : memref<256x256xbf16, #tpu.memory_space<vmem>>, vector<256x256xbf16>
    %cst_8 = arith.constant dense<0.000000e+00> : vector<128x256xf32>
    %8 = tpu.matmul %0, %7, %cst_8 {dimension_numbers = #tpu.dot_dimension_numbers<[1], [0], [0], [1], [0, 0, 1, 1], [], []>} : vector<128x256xbf16>, vector<256x256xbf16>, vector<128x256xf32> -> vector<128x256xf32>
    %9 = arith.truncf %8 : vector<128x256xf32> to vector<128x256xbf16>
    %c0_9 = arith.constant 0 : index
    %c0_10 = arith.constant 0 : index
    %10 = vector.load %arg6[%c0_9, %c0_10] : memref<128x256xbf16, #tpu.memory_space<vmem>>, vector<128x256xbf16>
    tpu.vector_store %arg6[%c0_9, %c0_10], %9 {strides = array<i32>} : memref<128x256xbf16, #tpu.memory_space<vmem>>, vector<128x256xbf16>,
    %c0_11 = arith.constant 0 : index
    %c0_12 = arith.constant 0 : index
    %11 = vector.load %arg4[%c0_11, %c0_12] : memref<256x256xbf16, #tpu.memory_space<vmem>>, vector<256x256xbf16>
    %cst_13 = arith.constant dense<0.000000e+00> : vector<128x256xf32>
    %12 = tpu.matmul %0, %11, %cst_13 {dimension_numbers = #tpu.dot_dimension_numbers<[1], [0], [0], [1], [0, 0, 1, 1], [], []>} : vector<128x256xbf16>, vector<256x256xbf16>, vector<128x256xf32> -> vector<128x256xf32>
    %13 = arith.truncf %12 : vector<128x256xf32> to vector<128x256xbf16>
    %c0_14 = arith.constant 0 : index
    %c0_15 = arith.constant 0 : index
    %14 = vector.load %arg7[%c0_14, %c0_15] : memref<128x256xbf16, #tpu.memory_space<vmem>>, vector<128x256xbf16>
    tpu.vector_store %arg7[%c0_14, %c0_15], %13 {strides = array<i32>} : memref<128x256xbf16, #tpu.memory_space<vmem>>, vector<128x256xbf16>,
    return
  }
  func.func @transform_0(%arg0: i32) -> (i32, i32) {
    %c0_i32 = arith.constant 0 : i32
    %c0_i32_0 = arith.constant 0 : i32
    return %arg0, %c0_i32 : i32, i32
  }
  func.func @transform_1(%arg0: i32) -> (i32, i32) {
    %c0_i32 = arith.constant 0 : i32
    %c0_i32_0 = arith.constant 0 : i32
    %c0_i32_1 = arith.constant 0 : i32
    return %c0_i32, %c0_i32_0 : i32, i32
  }
  func.func @transform_2(%arg0: i32) -> (i32, i32) {
    %c0_i32 = arith.constant 0 : i32
    %c0_i32_0 = arith.constant 0 : i32
    %c0_i32_1 = arith.constant 0 : i32
    return %c0_i32, %c0_i32_0 : i32, i32
  }
  func.func @transform_3(%arg0: i32) -> (i32, i32) {
    %c0_i32 = arith.constant 0 : i32
    %c0_i32_0 = arith.constant 0 : i32
    %c0_i32_1 = arith.constant 0 : i32
    return %c0_i32, %c0_i32_0 : i32, i32
  }
  func.func @transform_4(%arg0: i32) -> (i32, i32) {
    %c0_i32 = arith.constant 0 : i32
    %c0_i32_0 = arith.constant 0 : i32
    return %arg0, %c0_i32 : i32, i32
  }
  func.func @transform_5(%arg0: i32) -> (i32, i32) {
    %c0_i32 = arith.constant 0 : i32
    %c0_i32_0 = arith.constant 0 : i32
    return %arg0, %c0_i32 : i32, i32
  }
  func.func @transform_6(%arg0: i32) -> (i32, i32) {
    %c0_i32 = arith.constant 0 : i32
    %c0_i32_0 = arith.constant 0 : i32
    return %arg0, %c0_i32 : i32, i32
  }
}

</mosaic_0001>

<llo_original>
// kernel: tpu_custom_call.1
$region0: #{tpu_custom_call.1}
  #allocation0 [shape = 'u32[]', space=smem, size = 0x4, offset = 0x4, fixed_abs, tag = 'smem constant byte address 0x4 - core index']
  #allocation1 [shape = 'u32[144,128]{1,0:T(1,128)}', space=vmem, size = 0x12000, scoped, tag = 'internal scratch']
  %s0 = inlined_call_operand.hbm [shape: f32[8,128], index: 0, kind: input, shape index: {}]
  %s1 = inlined_call_operand.hbm [shape: f32[8,128], index: 1, kind: output, shape index: {}]
  %s2 = sld [smem:[#allocation0]]
  $region18: #{tpu_custom_call.1} parent=0
    _
  %s4 = ssub.s32 1, %s2
  %s5 = scalar_select 0, %s4, %s2
  $region1: #{tpu_custom_call.1} parent=0
    #allocation2 [shape = 'u8[4096]{0}', space=vmem, size = 0x1000, scoped, tag = 'input window, operand 0, single buffered']
    #allocation3 [shape = 's32[1]{0}', space=sflag, size = 0x4, scoped, tag = 'scoped memory for tpu_custom_call.1']
    #allocation4 [shape = 's32[1]{0}', space=sflag, size = 0x4, scoped, tag = 'scoped memory for tpu_custom_call.1']
    #allocation5 [shape = 'u8[4096]{0}', space=vmem, size = 0x1000, scoped, tag = 'output window, operand 0, single buffered']
    %6 = vsyncpa [#allocation3], 0
    %7 = vsyncpa [#allocation4], 0
    // Predicated region
    $region2: #{tpu_custom_call.1} parent=1 // pred_check
      _
    $region3: #{tpu_custom_call.1} parent=1 // pred_check_branch
      %9 = sbr.rel (0) target = $region5
    $region4: #{tpu_custom_call.1} parent=1 // pred_region
      %s11 = ssub.s32 128, 128
      %12 = vsyncadd [#allocation3], %s11
      %s14 = sshll.u32 [#allocation2], 4
      %s15 = int_to_ptr.vmem [resolvable:$true] %s14
      %17 = dma.hbm_to_vmem [thread:$0]  %s0, 128, %s15, [#allocation3]
    $region5: #{tpu_custom_call.1} parent=1 // pred_fallthru
      _
    // Predicated region
    $region6: #{tpu_custom_call.1} parent=1 // pred_check
      _
    $region7: #{tpu_custom_call.1} parent=1 // pred_check_branch
      %19 = sbr.rel (0) target = $region9
    $region8: #{tpu_custom_call.1} parent=1 // pred_region
      %20 = dma.done [#allocation3], 128
    $region9: #{tpu_custom_call.1} parent=1 // pred_fallthru
      _
    %v21 = vld [vmem:[#allocation2] sm:$0xff]
    %v22 = vadd.f32 %v21, 1.0
    %23 = vst [vmem:[#allocation5] sm:$0xff] %v22
    // Predicated region
    $region10: #{tpu_custom_call.1} parent=1 // pred_check
      _
    $region11: #{tpu_custom_call.1} parent=1 // pred_check_branch
      %25 = sbr.rel (0) target = $region13
    $region12: #{tpu_custom_call.1} parent=1 // pred_region
      %s27 = ssub.s32 128, 128
      %28 = vsyncadd [#allocation4], %s27
      %s30 = sshll.u32 [#allocation5], 4
      %s31 = int_to_ptr.vmem [resolvable:$true] %s30
      %33 = dma.vmem_to_hbm [thread:$0]  %s31, 128, %s1, [#allocation4]
    $region13: #{tpu_custom_call.1} parent=1 // pred_fallthru
      _
    // Predicated region
    $region14: #{tpu_custom_call.1} parent=1 // pred_check
      _
    $region15: #{tpu_custom_call.1} parent=1 // pred_check_branch
      %35 = sbr.rel (0) target = $region17
    $region16: #{tpu_custom_call.1} parent=1 // pred_region
      %36 = dma.done [#allocation4], 128
    $region17: #{tpu_custom_call.1} parent=1 // pred_fallthru
      _
    %37 = vsyncpa [#allocation3], 1
    %38 = vsyncpa [#allocation4], 1

// kernel: tpu_custom_call.1
$region0: #{tpu_custom_call.1}
  #allocation0 [shape = 'u32[]', space=smem, size = 0x4, offset = 0x4, fixed_abs, tag = 'smem constant byte address 0x4 - core index']
  #allocation1 [shape = 'u32[144,128]{1,0:T(1,128)}', space=vmem, size = 0x12000, scoped, tag = 'internal scratch']
  %s0 = inlined_call_operand.hbm [shape: bf16[384,256], index: 0, kind: input, shape index: {}]
  %s1 = inlined_call_operand.hbm [shape: bf16[256,256], index: 1, kind: input, shape index: {}]
  %s2 = inlined_call_operand.hbm [shape: bf16[256,256], index: 2, kind: input, shape index: {}]
  %s3 = inlined_call_operand.hbm [shape: bf16[256,256], index: 3, kind: input, shape index: {}]
  %s4 = inlined_call_operand.hbm [shape: bf16[384,256], index: 4, kind: output, shape index: {0}]
  %s5 = inlined_call_operand.hbm [shape: bf16[384,256], index: 5, kind: output, shape index: {1}]
  %s6 = inlined_call_operand.hbm [shape: bf16[384,256], index: 6, kind: output, shape index: {2}]
  %7 = xla_tuple %s4, %s5, %s6
  %s8 = sld [smem:[#allocation0]]
  $region81: #{tpu_custom_call.1} parent=0
    _
  %s10 = ssub.s32 1, %s8
  %s11 = scalar_select 0, %s10, %s8
  $region1: #{tpu_custom_call.1} parent=0
    #allocation2 [shape = 'u8[131072]{0}', space=vmem, size = 0x20000, scoped, tag = 'input window, operand 0']
    #allocation3 [shape = 's32[2]{0}', space=sflag, size = 0x8, scoped, tag = 'scoped memory for tpu_custom_call.1']
    #allocation4 [shape = 's32[2]{0}', space=sflag, size = 0x8, scoped, tag = 'scoped memory for tpu_custom_call.1']
    #allocation5 [shape = 'u8[131072]{0}', space=vmem, size = 0x20000, scoped, tag = 'input window, operand 1, single buffered']
    #allocation6 [shape = 's32[1]{0}', space=sflag, size = 0x4, scoped, tag = 'scoped memory for tpu_custom_call.1']
    #allocation7 [shape = 'u8[131072]{0}', space=vmem, size = 0x20000, scoped, tag = 'input window, operand 2, single buffered']
    #allocation8 [shape = 'u8[131072]{0}', space=vmem, size = 0x20000, scoped, tag = 'input window, operand 3, single buffered']
    #allocation9 [shape = 's32[1]{0}', space=sflag, size = 0x4, scoped, tag = 'scoped memory for tpu_custom_call.1']
    #allocation10 [shape = 'u8[131072]{0}', space=vmem, size = 0x20000, scoped, tag = 'output window, operand 0']
    #allocation11 [shape = 'u8[131072]{0}', space=vmem, size = 0x20000, scoped, tag = 'output window, operand 1']
    #allocation12 [shape = 's32[2]{0}', space=sflag, size = 0x8, scoped, tag = 'scoped memory for tpu_custom_call.1']
    #allocation13 [shape = 'u8[131072]{0}', space=vmem, size = 0x20000, scoped, tag = 'output window, operand 2']
    %12 = vsyncpa [#allocation3], 0
    %s13 = scalar_lea.sflag [#allocation3], 1
    %14 = vsyncpa %s13, 0
    %15 = vsyncpa [#allocation6], 0
    %16 = vsyncpa [#allocation9], 0
    %17 = vsyncpa [#allocation4], 0
    %s18 = scalar_lea.sflag [#allocation4], 1
    %19 = vsyncpa %s18, 0
    %20 = vsyncpa [#allocation12], 0
    %s21 = scalar_lea.sflag [#allocation12], 1
    %22 = vsyncpa %s21, 0
    loop: start=0, step=1, limit=5
    $region2: #{tpu_custom_call.1} parent=1 // loop_pre_header
      _
    $region3: #{tpu_custom_call.1} parent=1 // loop_header
      %s24 = sphi 0, %s28
      %p25 = scmp.ge.s32.totalorder %s24, 5
      %s34 = sphi 0, %s36
      %s37 = sphi 0, %s34
      %s38 = sphi 0, %s37
      %s54 = sphi 0, %s38
      %s58 = sphi 0, %s58
      %s60 = sphi 0, %s58
      %s61 = sphi 0, %s60
      %s75 = sphi 0, %s61
      %s79 = sphi 0, %s79
      %s81 = sphi 0, %s79
      %s82 = sphi 0, %s81
      %s96 = sphi 0, %s82
      %s100 = sphi 0, %s100
      %s102 = sphi 0, %s100
      %s103 = sphi 0, %s102
      %s117 = sphi 0, %s103
      %s123 = sphi 0, %s125
      %s126 = sphi 0, %s123
      %s127 = sphi 0, %s126
      %s143 = sphi 0, %s127
      %s149 = sphi 0, %s151
      %s152 = sphi 0, %s149
      %s153 = sphi 0, %s152
      %s169 = sphi 0, %s153
      %s175 = sphi 0, %s177
      %s178 = sphi 0, %s175
      %s179 = sphi 0, %s178
      %s195 = sphi 0, %s179
    $region4: #{tpu_custom_call.1} parent=1 // loop_header_branch
      %27 = sbr.rel (%p25) target = $region8
    $region5: #{tpu_custom_call.1} parent=1 // loop_body
      %s29 = ssub.s32 %s24, 1
      %s30 = ssub.s32 %s24, 2
      %s31 = sadd.s32 %s24, 1
      %s32 = ssub.s32 %s24, %s31
      %p33 = scmp.eq.s32.totalorder %s32, 0
      %s35 = sadd.s32 %s34, 1
      %s36 = scalar_select %p33, %s34, %s35
      %p39 = pneg %p33
      %p40 = scmp.eq.s32.totalorder %s24, 2
      %p41 = por %p39, %p40
      %p42 = scmp.ne.s32.totalorder %s34, %s37
      %p43 = scmp.eq.s32.totalorder %s24, 0
      %p44 = por %p42, %p43
      %p45 = scmp.ne.s32.totalorder %s34, %s37
      %p46 = scmp.eq.s32.totalorder %s29, 2
      %p47 = por %p45, %p46
      %p48 = scmp.ne.s32.totalorder %s37, %s38
      %p49 = scmp.eq.s32.totalorder %s29, 0
      %p50 = por %p48, %p49
      %p51 = scmp.ne.s32.totalorder %s37, %s38
      %p52 = scmp.eq.s32.totalorder %s30, 2
      %p53 = por %p51, %p52
      %p55 = scmp.ne.s32.totalorder %s38, %s54
      %p56 = scmp.eq.s32.totalorder %s30, 0
      %p57 = por %p55, %p56
      %s59 = sadd.s32 %s58, 1
      %p62 = scmp.eq.s32.totalorder %s24, 2
      %p63 = scmp.ne.s32.totalorder %s58, %s60
      %p64 = scmp.eq.s32.totalorder %s24, 0
      %p65 = por %p63, %p64
      %p66 = scmp.ne.s32.totalorder %s58, %s60
      %p67 = scmp.eq.s32.totalorder %s29, 2
      %p68 = por %p66, %p67
      %p69 = scmp.ne.s32.totalorder %s60, %s61
      %p70 = scmp.eq.s32.totalorder %s29, 0
      %p71 = por %p69, %p70
      %p72 = scmp.ne.s32.totalorder %s60, %s61
      %p73 = scmp.eq.s32.totalorder %s30, 2
      %p74 = por %p72, %p73
      %p76 = scmp.ne.s32.totalorder %s61, %s75
      %p77 = scmp.eq.s32.totalorder %s30, 0
      %p78 = por %p76, %p77
      %s80 = sadd.s32 %s79, 1
      %p83 = scmp.eq.s32.totalorder %s24, 2
      %p84 = scmp.ne.s32.totalorder %s79, %s81
      %p85 = scmp.eq.s32.totalorder %s24, 0
      %p86 = por %p84, %p85
      %p87 = scmp.ne.s32.totalorder %s79, %s81
      %p88 = scmp.eq.s32.totalorder %s29, 2
      %p89 = por %p87, %p88
      %p90 = scmp.ne.s32.totalorder %s81, %s82
      %p91 = scmp.eq.s32.totalorder %s29, 0
      %p92 = por %p90, %p91
      %p93 = scmp.ne.s32.totalorder %s81, %s82
      %p94 = scmp.eq.s32.totalorder %s30, 2
      %p95 = por %p93, %p94
      %p97 = scmp.ne.s32.totalorder %s82, %s96
      %p98 = scmp.eq.s32.totalorder %s30, 0
      %p99 = por %p97, %p98
      %s101 = sadd.s32 %s100, 1
      %p104 = scmp.eq.s32.totalorder %s24, 2
      %p105 = scmp.ne.s32.totalorder %s100, %s102
      %p106 = scmp.eq.s32.totalorder %s24, 0
      %p107 = por %p105, %p106
      %p108 = scmp.ne.s32.totalorder %s100, %s102
      %p109 = scmp.eq.s32.totalorder %s29, 2
      %p110 = por %p108, %p109
      %p111 = scmp.ne.s32.totalorder %s102, %s103
      %p112 = scmp.eq.s32.totalorder %s29, 0
      %p113 = por %p111, %p112
      %p114 = scmp.ne.s32.totalorder %s102, %s103
      %p115 = scmp.eq.s32.totalorder %s30, 2
      %p116 = por %p114, %p115
      %p118 = scmp.ne.s32.totalorder %s103, %s117
      %p119 = scmp.eq.s32.totalorder %s30, 0
      %p120 = por %p118, %p119
      %s121 = ssub.s32 %s24, %s31
      %p122 = scmp.eq.s32.totalorder %s121, 0
      %s124 = sadd.s32 %s123, 1
      %s125 = scalar_select %p122, %s123, %s124
      %p128 = pneg %p122
      %p129 = scmp.eq.s32.totalorder %s24, 2
      %p130 = por %p128, %p129
      %p131 = scmp.ne.s32.totalorder %s123, %s126
      %p132 = scmp.eq.s32.totalorder %s24, 0
      %p133 = por %p131, %p132
      %p134 = scmp.ne.s32.totalorder %s123, %s126
      %p135 = scmp.eq.s32.totalorder %s29, 2
      %p136 = por %p134, %p135
      %p137 = scmp.ne.s32.totalorder %s126, %s127
      %p138 = scmp.eq.s32.totalorder %s29, 0
      %p139 = por %p137, %p138
      %p140 = scmp.ne.s32.totalorder %s126, %s127
      %p141 = scmp.eq.s32.totalorder %s30, 2
      %p142 = por %p140, %p141
      %p144 = scmp.ne.s32.totalorder %s127, %s143
      %p145 = scmp.eq.s32.totalorder %s30, 0
      %p146 = por %p144, %p145
      %s147 = ssub.s32 %s24, %s31
      %p148 = scmp.eq.s32.totalorder %s147, 0
      %s150 = sadd.s32 %s149, 1
      %s151 = scalar_select %p148, %s149, %s150
      %p154 = pneg %p148
      %p155 = scmp.eq.s32.totalorder %s24, 2
      %p156 = por %p154, %p155
      %p157 = scmp.ne.s32.totalorder %s149, %s152
      %p158 = scmp.eq.s32.totalorder %s24, 0
      %p159 = por %p157, %p158
      %p160 = scmp.ne.s32.totalorder %s149, %s152
      %p161 = scmp.eq.s32.totalorder %s29, 2
      %p162 = por %p160, %p161
      %p163 = scmp.ne.s32.totalorder %s152, %s153
      %p164 = scmp.eq.s32.totalorder %s29, 0
      %p165 = por %p163, %p164
      %p166 = scmp.ne.s32.totalorder %s152, %s153
      %p167 = scmp.eq.s32.totalorder %s30, 2
      %p168 = por %p166, %p167
      %p170 = scmp.ne.s32.totalorder %s153, %s169
      %p171 = scmp.eq.s32.totalorder %s30, 0
      %p172 = por %p170, %p171
      %s173 = ssub.s32 %s24, %s31
      %p174 = scmp.eq.s32.totalorder %s173, 0
      %s176 = sadd.s32 %s175, 1
      %s177 = scalar_select %p174, %s175, %s176
      %p180 = pneg %p174
      %p181 = scmp.eq.s32.totalorder %s24, 2
      %p182 = por %p180, %p181
      %p183 = scmp.ne.s32.totalorder %s175, %s178
      %p184 = scmp.eq.s32.totalorder %s24, 0
      %p185 = por %p183, %p184
      %p186 = scmp.ne.s32.totalorder %s175, %s178
      %p187 = scmp.eq.s32.totalorder %s29, 2
      %p188 = por %p186, %p187
      %p189 = scmp.ne.s32.totalorder %s178, %s179
      %p190 = scmp.eq.s32.totalorder %s29, 0
      %p191 = por %p189, %p190
      %p192 = scmp.ne.s32.totalorder %s178, %s179
      %p193 = scmp.eq.s32.totalorder %s30, 2
      %p194 = por %p192, %p193
      %p196 = scmp.ne.s32.totalorder %s179, %s195
      %p197 = scmp.eq.s32.totalorder %s30, 0
      %p198 = por %p196, %p197
      %p199 = scmp.le.s32.totalorder 1, %s24
      %p200 = scmp.lt.s32.totalorder %s24, 4
      %p201 = pnand %p199, %p200
      %p202 = pneg %p201
      // Predicated region
      $region9: #{tpu_custom_call.1} parent=5 // pred_check
        _
      $region10: #{tpu_custom_call.1} parent=5 // pred_check_branch
        %204 = sbr.rel (%p201) target = $region12
      $region11: #{tpu_custom_call.1} parent=5 // pred_region
        %s205 = ssub.s32 %s24, 1
        // Predicated region
        $region13: #{tpu_custom_call.1} parent=11 // pred_check
          %p206 = pneg %p71
        $region14: #{tpu_custom_call.1} parent=11 // pred_check_branch
          %208 = sbr.rel (%p206) target = $region16
        $region15: #{tpu_custom_call.1} parent=11 // pred_region
          %s210 = ssub.s32 4096, 4096
          %211 = vsyncadd [#allocation6], %s210
          %s212 = sshll.u32 [#allocation5], 4
          %s213 = int_to_ptr.vmem [resolvable:$true] %s212
          %218 = dma.hbm_to_vmem [thread:$0]  %s1, 4096, %s213, [#allocation6], 128, 128, 8
        $region16: #{tpu_custom_call.1} parent=11 // pred_fallthru
          _
        // Predicated region
        $region17: #{tpu_custom_call.1} parent=11 // pred_check
          %p219 = pneg %p92
        $region18: #{tpu_custom_call.1} parent=11 // pred_check_branch
          %221 = sbr.rel (%p219) target = $region20
        $region19: #{tpu_custom_call.1} parent=11 // pred_region
          %s223 = ssub.s32 4096, 4096
          %224 = vsyncadd [#allocation6], %s223
          %s225 = sshll.u32 [#allocation7], 4
          %s226 = int_to_ptr.vmem [resolvable:$true] %s225
          %231 = dma.hbm_to_vmem [thread:$0]  %s2, 4096, %s226, [#allocation6], 128, 128, 8
        $region20: #{tpu_custom_call.1} parent=11 // pred_fallthru
          _
        // Predicated region
        $region21: #{tpu_custom_call.1} parent=11 // pred_check
          %p232 = pneg %p113
        $region22: #{tpu_custom_call.1} parent=11 // pred_check_branch
          %234 = sbr.rel (%p232) target = $region24
        $region23: #{tpu_custom_call.1} parent=11 // pred_region
          %s236 = ssub.s32 4096, 4096
          %237 = vsyncadd [#allocation9], %s236
          %s238 = sshll.u32 [#allocation8], 4
          %s239 = int_to_ptr.vmem [resolvable:$true] %s238
          %244 = dma.hbm_to_vmem [thread:$0]  %s3, 4096, %s239, [#allocation9], 128, 128, 8
        $region24: #{tpu_custom_call.1} parent=11 // pred_fallthru
          _
      $region12: #{tpu_custom_call.1} parent=5 // pred_fallthru
        _
      %p245 = scmp.lt.s32.totalorder %s24, 3
      // Predicated region
      $region25: #{tpu_custom_call.1} parent=5 // pred_check
        %p246 = pneg %p245
      $region26: #{tpu_custom_call.1} parent=5 // pred_check_branch
        %248 = sbr.rel (%p246) target = $region28
      $region27: #{tpu_custom_call.1} parent=5 // pred_region
        // Predicated region
        $region29: #{tpu_custom_call.1} parent=27 // pred_check
          %p249 = pneg %p44
        $region30: #{tpu_custom_call.1} parent=27 // pred_check_branch
          %251 = sbr.rel (%p249) target = $region32
        $region31: #{tpu_custom_call.1} parent=27 // pred_region
          %s252 = sand.u32 %s34, 1
          %s253 = scalar_lea.sflag [#allocation3], %s252
          %s254 = sand.u32 %s34, 1
          %s255 = smul.addr %s254, 128
          %s256 = scalar_lea.vmem [#allocation2], %s255
          %s257 = smul.u32 16, %s24
          %s259 = ssub.s32 2048, 2048
          %260 = vsyncadd %s253, %s259
          %s261 = smul.addr %s257, 2
          %s262 = smul.addr %s261, 64
          %s263 = scalar_lea.hbm %s0, %s262
          %s264 = sshll.u32 %s256, 4
          %s265 = int_to_ptr.vmem [resolvable:$true] %s264
          %270 = dma.hbm_to_vmem [thread:$0]  %s263, 2048, %s265, %s253, 128, 128, 8
        $region32: #{tpu_custom_call.1} parent=27 // pred_fallthru
          _
      $region28: #{tpu_custom_call.1} parent=5 // pred_fallthru
        _
      %p271 = scmp.le.s32.totalorder 1, %s24
      %p272 = scmp.lt.s32.totalorder %s24, 4
      %p273 = pnand %p271, %p272
      %p274 = pneg %p273
      // Predicated region
      $region33: #{tpu_custom_call.1} parent=5 // pred_check
        _
      $region34: #{tpu_custom_call.1} parent=5 // pred_check_branch
        %276 = sbr.rel (%p273) target = $region36
      $region35: #{tpu_custom_call.1} parent=5 // pred_region
        %s277 = ssub.s32 %s24, 1
        %s278 = sand.u32 %s37, 1
        %s279 = scalar_lea.sflag [#allocation3], %s278
        %s280 = sand.u32 %s37, 1
        %s281 = smul.addr %s280, 128
        %s282 = scalar_lea.vmem [#allocation2], %s281
        // Predicated region
        $region37: #{tpu_custom_call.1} parent=35 // pred_check
          %p283 = pneg %p50
        $region38: #{tpu_custom_call.1} parent=35 // pred_check_branch
          %285 = sbr.rel (%p283) target = $region40
        $region39: #{tpu_custom_call.1} parent=35 // pred_region
          %286 = dma.done %s279, 2048
        $region40: #{tpu_custom_call.1} parent=35 // pred_fallthru
          _
        // Predicated region
        $region41: #{tpu_custom_call.1} parent=35 // pred_check
          %p287 = pneg %p71
        $region42: #{tpu_custom_call.1} parent=35 // pred_check_branch
          %289 = sbr.rel (%p287) target = $region44
        $region43: #{tpu_custom_call.1} parent=35 // pred_region
          %290 = dma.done [#allocation6], 4096
        $region44: #{tpu_custom_call.1} parent=35 // pred_fallthru
          _
        // Predicated region
        $region45: #{tpu_custom_call.1} parent=35 // pred_check
          %p291 = pneg %p92
        $region46: #{tpu_custom_call.1} parent=35 // pred_check_branch
          %293 = sbr.rel (%p291) target = $region48
        $region47: #{tpu_custom_call.1} parent=35 // pred_region
          %294 = dma.done [#allocation6], 4096
        $region48: #{tpu_custom_call.1} parent=35 // pred_fallthru
          _
        // Predicated region
        $region49: #{tpu_custom_call.1} parent=35 // pred_check
          %p295 = pneg %p113
        $region50: #{tpu_custom_call.1} parent=35 // pred_check_branch
          %297 = sbr.rel (%p295) target = $region52
        $region51: #{tpu_custom_call.1} parent=35 // pred_region
          %298 = dma.done [#allocation9], 4096
        $region52: #{tpu_custom_call.1} parent=35 // pred_fallthru
          _
        %s299 = sand.u32 %s37, 1
        %s300 = scalar_lea.sflag [#allocation3], %s299
        %s301 = sand.u32 %s37, 1
        %s302 = smul.addr %s301, 128
        %s303 = scalar_lea.vmem [#allocation2], %s302
        %p304 = pneg %p50
        %p305 = pneg %p47
        %p306 = pneg %p71
        %p307 = pneg %p68
        %p308 = pneg %p92
        %p309 = pneg %p89
        %p310 = pneg %p113
        %p311 = pneg %p110
        %p312 = pneg %p139
        %p313 = pneg %p136
        %s314 = sand.u32 %s126, 1
        %s315 = scalar_lea.sflag [#allocation4], %s314
        %s316 = sand.u32 %s126, 1
        %s317 = smul.addr %s316, 128
        %s318 = scalar_lea.vmem [#allocation10], %s317
        %p319 = pneg %p165
        %p320 = pneg %p162
        %s321 = sand.u32 %s29, 1
        %s322 = scalar_lea.sflag [#allocation12], %s321
        %s323 = sand.u32 %s152, 1
        %s324 = smul.addr %s323, 128
        %s325 = scalar_lea.vmem [#allocation11], %s324
        %p326 = pneg %p191
        %p327 = pneg %p188
        %s328 = sand.u32 %s29, 1
        %s329 = scalar_lea.sflag [#allocation12], %s328
        %s330 = sand.u32 %s178, 1
        %s331 = smul.addr %s330, 128
        %s332 = scalar_lea.vmem [#allocation13], %s331
        %s333 = smul.u32 16, %s29
        %s334 = smul.u32 16, %s29
        %s335 = smul.u32 16, %s29
        %s336 = smul.u32 16, %s29
        %v337 = vld [vmem:[%s282] sm:$0xff]
        %v338 = vld [vmem:[%s282 + $0x8] sm:$0xff]
        %v339 = vld [vmem:[%s282 + $0x10] sm:$0xff]
        %v340 = vld [vmem:[%s282 + $0x18] sm:$0xff]
        %v341 = vld [vmem:[%s282 + $0x20] sm:$0xff]
        %v342 = vld [vmem:[%s282 + $0x28] sm:$0xff]
        %v343 = vld [vmem:[%s282 + $0x30] sm:$0xff]
        %v344 = vld [vmem:[%s282 + $0x38] sm:$0xff]
        %v345 = vld [vmem:[%s282 + $0x40] sm:$0xff]
        %v346 = vld [vmem:[%s282 + $0x48] sm:$0xff]
        %v347 = vld [vmem:[%s282 + $0x50] sm:$0xff]
        %v348 = vld [vmem:[%s282 + $0x58] sm:$0xff]
        %v349 = vld [vmem:[%s282 + $0x60] sm:$0xff]
        %v350 = vld [vmem:[%s282 + $0x68] sm:$0xff]
        %v351 = vld [vmem:[%s282 + $0x70] sm:$0xff]
        %v352 = vld [vmem:[%s282 + $0x78] sm:$0xff]
        %v353 = vld [vmem:[#allocation5] sm:$0xff]
        %v354 = vld [vmem:[#allocation5 + $0x8] sm:$0xff]
        %v355 = vld [vmem:[#allocation5 + $0x10] sm:$0xff]
        %v356 = vld [vmem:[#allocation5 + $0x18] sm:$0xff]
        %v357 = vld [vmem:[#allocation5 + $0x20] sm:$0xff]
        %v358 = vld [vmem:[#allocation5 + $0x28] sm:$0xff]
        %v359 = vld [vmem:[#allocation5 + $0x30] sm:$0xff]
        %v360 = vld [vmem:[#allocation5 + $0x38] sm:$0xff]
        %v361 = vld [vmem:[#allocation5 + $0x40] sm:$0xff]
        %v362 = vld [vmem:[#allocation5 + $0x48] sm:$0xff]
        %v363 = vld [vmem:[#allocation5 + $0x50] sm:$0xff]
        %v364 = vld [vmem:[#allocation5 + $0x58] sm:$0xff]
        %v365 = vld [vmem:[#allocation5 + $0x60] sm:$0xff]
        %v366 = vld [vmem:[#allocation5 + $0x68] sm:$0xff]
        %v367 = vld [vmem:[#allocation5 + $0x70] sm:$0xff]
        %v368 = vld [vmem:[#allocation5 + $0x78] sm:$0xff]
        %v369 = vld [vmem:[#allocation5 + $0x80] sm:$0xff]
        %v370 = vld [vmem:[#allocation5 + $0x88] sm:$0xff]
        %v371 = vld [vmem:[#allocation5 + $0x90] sm:$0xff]
        %v372 = vld [vmem:[#allocation5 + $0x98] sm:$0xff]
        %v373 = vld [vmem:[#allocation5 + $0xa0] sm:$0xff]
        %v374 = vld [vmem:[#allocation5 + $0xa8] sm:$0xff]
        %v375 = vld [vmem:[#allocation5 + $0xb0] sm:$0xff]
        %v376 = vld [vmem:[#allocation5 + $0xb8] sm:$0xff]
        %v377 = vld [vmem:[#allocation5 + $0xc0] sm:$0xff]
        %v378 = vld [vmem:[#allocation5 + $0xc8] sm:$0xff]
        %v379 = vld [vmem:[#allocation5 + $0xd0] sm:$0xff]
        %v380 = vld [vmem:[#allocation5 + $0xd8] sm:$0xff]
        %v381 = vld [vmem:[#allocation5 + $0xe0] sm:$0xff]
        %v382 = vld [vmem:[#allocation5 + $0xe8] sm:$0xff]
        %v383 = vld [vmem:[#allocation5 + $0xf0] sm:$0xff]
        %v384 = vld [vmem:[#allocation5 + $0xf8] sm:$0xff]
        %v401 = vunpack.c.l.b16 %v337
        %v402 = vunpack.c.h.b16 %v337
        %v403 = vunpack.c.l.b16 %v338
        %v404 = vunpack.c.h.b16 %v338
        %v405 = vunpack.c.l.b16 %v339
        %v406 = vunpack.c.h.b16 %v339
        %v407 = vunpack.c.l.b16 %v340
        %v408 = vunpack.c.h.b16 %v340
        %v409 = vunpack.c.l.b16 %v341
        %v410 = vunpack.c.h.b16 %v341
        %v411 = vunpack.c.l.b16 %v342
        %v412 = vunpack.c.h.b16 %v342
        %v413 = vunpack.c.l.b16 %v343
        %v414 = vunpack.c.h.b16 %v343
        %v415 = vunpack.c.l.b16 %v344
        %v416 = vunpack.c.h.b16 %v344
        %v417 = vunpack.c.l.b16 %v345
        %v418 = vunpack.c.h.b16 %v345
        %v419 = vunpack.c.l.b16 %v346
        %v420 = vunpack.c.h.b16 %v346
        %v421 = vunpack.c.l.b16 %v347
        %v422 = vunpack.c.h.b16 %v347
        %v423 = vunpack.c.l.b16 %v348
        %v424 = vunpack.c.h.b16 %v348
        %v425 = vunpack.c.l.b16 %v349
        %v426 = vunpack.c.h.b16 %v349
        %v427 = vunpack.c.l.b16 %v350
        %v428 = vunpack.c.h.b16 %v350
        %v429 = vunpack.c.l.b16 %v351
        %v430 = vunpack.c.h.b16 %v351
        %v431 = vunpack.c.l.b16 %v352
        %v432 = vunpack.c.h.b16 %v352
        %v433 = vpack.c.b16 %v403, %v401
        %v434 = vpack.c.b16 %v404, %v402
        %v435 = vpack.c.b16 %v407, %v405
        %v436 = vpack.c.b16 %v408, %v406
        %v437 = vpack.c.b16 %v411, %v409
        %v438 = vpack.c.b16 %v412, %v410
        %v439 = vpack.c.b16 %v415, %v413
        %v440 = vpack.c.b16 %v416, %v414
        %v441 = vpack.c.b16 %v419, %v417
        %v442 = vpack.c.b16 %v420, %v418
        %v443 = vpack.c.b16 %v423, %v421
        %v444 = vpack.c.b16 %v424, %v422
        %v445 = vpack.c.b16 %v427, %v425
        %v446 = vpack.c.b16 %v428, %v426
        %v447 = vpack.c.b16 %v431, %v429
        %v448 = vpack.c.b16 %v432, %v430
        %v497 = vunpack.c.l.b16 %v353
        %v498 = vunpack.c.h.b16 %v353
        %v499 = vunpack.c.l.b16 %v354
        %v500 = vunpack.c.h.b16 %v354
        %v501 = vunpack.c.l.b16 %v355
        %v502 = vunpack.c.h.b16 %v355
        %v503 = vunpack.c.l.b16 %v356
        %v504 = vunpack.c.h.b16 %v356
        %v505 = vunpack.c.l.b16 %v357
        %v506 = vunpack.c.h.b16 %v357
        %v507 = vunpack.c.l.b16 %v358
        %v508 = vunpack.c.h.b16 %v358
        %v509 = vunpack.c.l.b16 %v359
        %v510 = vunpack.c.h.b16 %v359
        %v511 = vunpack.c.l.b16 %v360
        %v512 = vunpack.c.h.b16 %v360
        %v513 = vunpack.c.l.b16 %v361
        %v514 = vunpack.c.h.b16 %v361
        %v515 = vunpack.c.l.b16 %v362
        %v516 = vunpack.c.h.b16 %v362
        %v517 = vunpack.c.l.b16 %v363
        %v518 = vunpack.c.h.b16 %v363
        %v519 = vunpack.c.l.b16 %v364
        %v520 = vunpack.c.h.b16 %v364
        %v521 = vunpack.c.l.b16 %v365
        %v522 = vunpack.c.h.b16 %v365
        %v523 = vunpack.c.l.b16 %v366
        %v524 = vunpack.c.h.b16 %v366
        %v525 = vunpack.c.l.b16 %v367
        %v526 = vunpack.c.h.b16 %v367
        %v527 = vunpack.c.l.b16 %v368
        %v528 = vunpack.c.h.b16 %v368
        %v529 = vunpack.c.l.b16 %v369
        %v530 = vunpack.c.h.b16 %v369
        %v531 = vunpack.c.l.b16 %v370
        %v532 = vunpack.c.h.b16 %v370
        %v533 = vunpack.c.l.b16 %v371
        %v534 = vunpack.c.h.b16 %v371
        %v535 = vunpack.c.l.b16 %v372
        %v536 = vunpack.c.h.b16 %v372
        %v537 = vunpack.c.l.b16 %v373
        %v538 = vunpack.c.h.b16 %v373
        %v539 = vunpack.c.l.b16 %v374
        %v540 = vunpack.c.h.b16 %v374
        %v541 = vunpack.c.l.b16 %v375
        %v542 = vunpack.c.h.b16 %v375
        %v543 = vunpack.c.l.b16 %v376
        %v544 = vunpack.c.h.b16 %v376
        %v545 = vunpack.c.l.b16 %v377
        %v546 = vunpack.c.h.b16 %v377
        %v547 = vunpack.c.l.b16 %v378
        %v548 = vunpack.c.h.b16 %v378
        %v549 = vunpack.c.l.b16 %v379
        %v550 = vunpack.c.h.b16 %v379
        %v551 = vunpack.c.l.b16 %v380
        %v552 = vunpack.c.h.b16 %v380
        %v553 = vunpack.c.l.b16 %v381
        %v554 = vunpack.c.h.b16 %v381
        %v555 = vunpack.c.l.b16 %v382
        %v556 = vunpack.c.h.b16 %v382
        %v557 = vunpack.c.l.b16 %v383
        %v558 = vunpack.c.h.b16 %v383
        %v559 = vunpack.c.l.b16 %v384
        %v560 = vunpack.c.h.b16 %v384
        %v561 = vpack.c.b16 %v499, %v497
        %v562 = vpack.c.b16 %v500, %v498
        %v563 = vpack.c.b16 %v503, %v501
        %v564 = vpack.c.b16 %v504, %v502
        %v565 = vpack.c.b16 %v507, %v505
        %v566 = vpack.c.b16 %v508, %v506
        %v567 = vpack.c.b16 %v511, %v509
        %v568 = vpack.c.b16 %v512, %v510
        %v569 = vpack.c.b16 %v515, %v513
        %v570 = vpack.c.b16 %v516, %v514
        %v571 = vpack.c.b16 %v519, %v517
        %v572 = vpack.c.b16 %v520, %v518
        %v573 = vpack.c.b16 %v523, %v521
        %v574 = vpack.c.b16 %v524, %v522
        %v575 = vpack.c.b16 %v527, %v525
        %v576 = vpack.c.b16 %v528, %v526
        %v577 = vpack.c.b16 %v531, %v529
        %v578 = vpack.c.b16 %v532, %v530
        %v579 = vpack.c.b16 %v535, %v533
        %v580 = vpack.c.b16 %v536, %v534
        %v581 = vpack.c.b16 %v539, %v537
        %v582 = vpack.c.b16 %v540, %v538
        %v583 = vpack.c.b16 %v543, %v541
        %v584 = vpack.c.b16 %v544, %v542
        %v585 = vpack.c.b16 %v547, %v545
        %v586 = vpack.c.b16 %v548, %v546
        %v587 = vpack.c.b16 %v551, %v549
        %v588 = vpack.c.b16 %v552, %v550
        %v589 = vpack.c.b16 %v555, %v553
        %v590 = vpack.c.b16 %v556, %v554
        %v591 = vpack.c.b16 %v559, %v557
        %v592 = vpack.c.b16 %v560, %v558
        %625 = vmatprep.subr.bf16.mxu0 %v562
        %626 = vmatpush1.bf16.msra.mxu0 %v561
        %627 = vmatprep.subr.bf16.mxu0 %v564
        %628 = vmatpush1.bf16.msra.mxu0 %v563
        %629 = vmatprep.subr.bf16.mxu0 %v566
        %630 = vmatpush1.bf16.msra.mxu0 %v565
        %631 = vmatprep.subr.bf16.mxu0 %v568
        %632 = vmatpush1.bf16.msra.mxu0 %v567
        %633 = vmatprep.subr.bf16.mxu0 %v570
        %634 = vmatpush1.bf16.msra.mxu0 %v569
        %635 = vmatprep.subr.bf16.mxu0 %v572
        %636 = vmatpush1.bf16.msra.mxu0 %v571
        %637 = vmatprep.subr.bf16.mxu0 %v574
        %638 = vmatpush1.bf16.msra.mxu0 %v573
        %639 = vmatprep.subr.bf16.mxu0 %v576
        %640 = vmatpush1.bf16.msra.mxu0 %v575
        %641 = vmatprep.subr.bf16.mxu0 %v578
        %642 = vmatpush1.bf16.msra.mxu0 %v577
        %643 = vmatprep.subr.bf16.mxu0 %v580
        %644 = vmatpush1.bf16.msra.mxu0 %v579
        %645 = vmatprep.subr.bf16.mxu0 %v582
        %646 = vmatpush1.bf16.msra.mxu0 %v581
        %647 = vmatprep.subr.bf16.mxu0 %v584
        %648 = vmatpush1.bf16.msra.mxu0 %v583
        %649 = vmatprep.subr.bf16.mxu0 %v586
        %650 = vmatpush1.bf16.msra.mxu0 %v585
        %651 = vmatprep.subr.bf16.mxu0 %v588
        %652 = vmatpush1.bf16.msra.mxu0 %v587
        %653 = vmatprep.subr.bf16.mxu0 %v590
        %654 = vmatpush1.bf16.msra.mxu0 %v589
        %655 = vmatprep.subr.bf16.mxu0 %v592
        %656 = vmatpush1.bf16.msra.mxu0 %v591
        %657 = vmatprep.mubr.bf16.mxu0 %v434
        %658 = vmatmul.mubr.bf16.gmra.mrb[0].mxu0 %v433
        %v659 = vpop.f32.mrb[0].mxu0
        %v660 = vadd.f32 0.0, %v659
        %v661 = vpop.f32.mrb[0].mxu0
        %v662 = vadd.f32 0.0, %v661
        %v663 = vpop.f32.mrb[0].mxu0
        %v664 = vadd.f32 0.0, %v663
        %v665 = vpop.f32.mrb[0].mxu0
        %v666 = vadd.f32 0.0, %v665
        %667 = vmatprep.mubr.bf16.mxu0 %v436
        %668 = vmatmul.mubr.bf16.gmra.mrb[0].mxu0 %v435
        %v669 = vpop.f32.mrb[0].mxu0
        %v670 = vadd.f32 0.0, %v669
        %v671 = vpop.f32.mrb[0].mxu0
        %v672 = vadd.f32 0.0, %v671
        %v673 = vpop.f32.mrb[0].mxu0
        %v674 = vadd.f32 0.0, %v673
        %v675 = vpop.f32.mrb[0].mxu0
        %v676 = vadd.f32 0.0, %v675
        %677 = vmatprep.mubr.bf16.mxu0 %v438
        %678 = vmatmul.mubr.bf16.gmra.mrb[0].mxu0 %v437
        %v679 = vpop.f32.mrb[0].mxu0
        %v680 = vadd.f32 0.0, %v679
        %v681 = vpop.f32.mrb[0].mxu0
        %v682 = vadd.f32 0.0, %v681
        %v683 = vpop.f32.mrb[0].mxu0
        %v684 = vadd.f32 0.0, %v683
        %v685 = vpop.f32.mrb[0].mxu0
        %v686 = vadd.f32 0.0, %v685
        %687 = vmatprep.mubr.bf16.mxu0 %v440
        %688 = vmatmul.mubr.bf16.gmra.mrb[0].mxu0 %v439
        %v689 = vpop.f32.mrb[0].mxu0
        %v690 = vadd.f32 0.0, %v689
        %v691 = vpop.f32.mrb[0].mxu0
        %v692 = vadd.f32 0.0, %v691
        %v693 = vpop.f32.mrb[0].mxu0
        %v694 = vadd.f32 0.0, %v693
        %v695 = vpop.f32.mrb[0].mxu0
        %v696 = vadd.f32 0.0, %v695
        %697 = vmatprep.mubr.bf16.mxu0 %v442
        %698 = vmatmul.mubr.bf16.gmra.mrb[0].mxu0 %v441
        %v699 = vpop.f32.mrb[0].mxu0
        %v700 = vadd.f32 0.0, %v699
        %v701 = vpop.f32.mrb[0].mxu0
        %v702 = vadd.f32 0.0, %v701
        %v703 = vpop.f32.mrb[0].mxu0
        %v704 = vadd.f32 0.0, %v703
        %v705 = vpop.f32.mrb[0].mxu0
        %v706 = vadd.f32 0.0, %v705
        %707 = vmatprep.mubr.bf16.mxu0 %v444
        %708 = vmatmul.mubr.bf16.gmra.mrb[0].mxu0 %v443
        %v709 = vpop.f32.mrb[0].mxu0
        %v710 = vadd.f32 0.0, %v709
        %v711 = vpop.f32.mrb[0].mxu0
        %v712 = vadd.f32 0.0, %v711
        %v713 = vpop.f32.mrb[0].mxu0
        %v714 = vadd.f32 0.0, %v713
        %v715 = vpop.f32.mrb[0].mxu0
        %v716 = vadd.f32 0.0, %v715
        %717 = vmatprep.mubr.bf16.mxu0 %v446
        %718 = vmatmul.mubr.bf16.gmra.mrb[0].mxu0 %v445
        %v719 = vpop.f32.mrb[0].mxu0
        %v720 = vadd.f32 0.0, %v719
        %v721 = vpop.f32.mrb[0].mxu0
        %v722 = vadd.f32 0.0, %v721
        %v723 = vpop.f32.mrb[0].mxu0
        %v724 = vadd.f32 0.0, %v723
        %v725 = vpop.f32.mrb[0].mxu0
        %v726 = vadd.f32 0.0, %v725
        %727 = vmatprep.mubr.bf16.mxu0 %v448
        %728 = vmatmul.mubr.bf16.gmra.mrb[0].mxu0 %v447
        %v729 = vpop.f32.mrb[0].mxu0
        %v730 = vadd.f32 0.0, %v729
        %v731 = vpop.f32.mrb[0].mxu0
        %v732 = vadd.f32 0.0, %v731
        %v733 = vpop.f32.mrb[0].mxu0
        %v734 = vadd.f32 0.0, %v733
        %v735 = vpop.f32.mrb[0].mxu0
        %v736 = vadd.f32 0.0, %v735
        %737 = vdwg.mxu0
        %v738 = vmul.f32 %v660, 0.06
        %v739 = vmul.f32 %v662, 0.06
        %v740 = vmul.f32 %v664, 0.06
        %v741 = vmul.f32 %v666, 0.06
        %v742 = vmul.f32 %v670, 0.06
        %v743 = vmul.f32 %v672, 0.06
        %v744 = vmul.f32 %v674, 0.06
        %v745 = vmul.f32 %v676, 0.06
        %v746 = vmul.f32 %v680, 0.06
        %v747 = vmul.f32 %v682, 0.06
        %v748 = vmul.f32 %v684, 0.06
        %v749 = vmul.f32 %v686, 0.06
        %v750 = vmul.f32 %v690, 0.06
        %v751 = vmul.f32 %v692, 0.06
        %v752 = vmul.f32 %v694, 0.06
        %v753 = vmul.f32 %v696, 0.06
        %v754 = vmul.f32 %v700, 0.06
        %v755 = vmul.f32 %v702, 0.06
        %v756 = vmul.f32 %v704, 0.06
        %v757 = vmul.f32 %v706, 0.06
        %v758 = vmul.f32 %v710, 0.06
        %v759 = vmul.f32 %v712, 0.06
        %v760 = vmul.f32 %v714, 0.06
        %v761 = vmul.f32 %v716, 0.06
        %v762 = vmul.f32 %v720, 0.06
        %v763 = vmul.f32 %v722, 0.06
        %v764 = vmul.f32 %v724, 0.06
        %v765 = vmul.f32 %v726, 0.06
        %v766 = vmul.f32 %v730, 0.06
        %v767 = vmul.f32 %v732, 0.06
        %v768 = vmul.f32 %v734, 0.06
        %v769 = vmul.f32 %v736, 0.06
        %v770 = vpack.c.bf16 %v740, %v738
        %v771 = vpack.c.bf16 %v741, %v739
        %v772 = vpack.c.bf16 %v744, %v742
        %v773 = vpack.c.bf16 %v745, %v743
        %v774 = vpack.c.bf16 %v748, %v746
        %v775 = vpack.c.bf16 %v749, %v747
        %v776 = vpack.c.bf16 %v752, %v750
        %v777 = vpack.c.bf16 %v753, %v751
        %v778 = vpack.c.bf16 %v756, %v754
        %v779 = vpack.c.bf16 %v757, %v755
        %v780 = vpack.c.bf16 %v760, %v758
        %v781 = vpack.c.bf16 %v761, %v759
        %v782 = vpack.c.bf16 %v764, %v762
        %v783 = vpack.c.bf16 %v765, %v763
        %v784 = vpack.c.bf16 %v768, %v766
        %v785 = vpack.c.bf16 %v769, %v767
        %v802 = vunpack.c.l.b16 %v770
        %v803 = vunpack.c.l.b16 %v771
        %v804 = vunpack.c.h.b16 %v770
        %v805 = vunpack.c.h.b16 %v771
        %v806 = vunpack.c.l.b16 %v772
        %v807 = vunpack.c.l.b16 %v773
        %v808 = vunpack.c.h.b16 %v772
        %v809 = vunpack.c.h.b16 %v773
        %v810 = vunpack.c.l.b16 %v774
        %v811 = vunpack.c.l.b16 %v775
        %v812 = vunpack.c.h.b16 %v774
        %v813 = vunpack.c.h.b16 %v775
        %v814 = vunpack.c.l.b16 %v776
        %v815 = vunpack.c.l.b16 %v777
        %v816 = vunpack.c.h.b16 %v776
        %v817 = vunpack.c.h.b16 %v777
        %v818 = vunpack.c.l.b16 %v778
        %v819 = vunpack.c.l.b16 %v779
        %v820 = vunpack.c.h.b16 %v778
        %v821 = vunpack.c.h.b16 %v779
        %v822 = vunpack.c.l.b16 %v780
        %v823 = vunpack.c.l.b16 %v781
        %v824 = vunpack.c.h.b16 %v780
        %v825 = vunpack.c.h.b16 %v781
        %v826 = vunpack.c.l.b16 %v782
        %v827 = vunpack.c.l.b16 %v783
        %v828 = vunpack.c.h.b16 %v782
        %v829 = vunpack.c.h.b16 %v783
        %v830 = vunpack.c.l.b16 %v784
        %v831 = vunpack.c.l.b16 %v785
        %v832 = vunpack.c.h.b16 %v784
        %v833 = vunpack.c.h.b16 %v785
        %v834 = vpack.c.b16 %v803, %v802
        %v835 = vpack.c.b16 %v805, %v804
        %v836 = vpack.c.b16 %v807, %v806
        %v837 = vpack.c.b16 %v809, %v808
        %v838 = vpack.c.b16 %v811, %v810
        %v839 = vpack.c.b16 %v813, %v812
        %v840 = vpack.c.b16 %v815, %v814
        %v841 = vpack.c.b16 %v817, %v816
        %v842 = vpack.c.b16 %v819, %v818
        %v843 = vpack.c.b16 %v821, %v820
        %v844 = vpack.c.b16 %v823, %v822
        %v845 = vpack.c.b16 %v825, %v824
        %v846 = vpack.c.b16 %v827, %v826
        %v847 = vpack.c.b16 %v829, %v828
        %v848 = vpack.c.b16 %v831, %v830
        %v849 = vpack.c.b16 %v833, %v832
        %866 = vst [vmem:[%s318] sm:$0xff] %v834
        %867 = vst [vmem:[%s318 + $0x8] sm:$0xff] %v835
        %868 = vst [vmem:[%s318 + $0x10] sm:$0xff] %v836
        %869 = vst [vmem:[%s318 + $0x18] sm:$0xff] %v837
        %870 = vst [vmem:[%s318 + $0x20] sm:$0xff] %v838
        %871 = vst [vmem:[%s318 + $0x28] sm:$0xff] %v839
        %872 = vst [vmem:[%s318 + $0x30] sm:$0xff] %v840
        %873 = vst [vmem:[%s318 + $0x38] sm:$0xff] %v841
        %874 = vst [vmem:[%s318 + $0x40] sm:$0xff] %v842
        %875 = vst [vmem:[%s318 + $0x48] sm:$0xff] %v843
        %876 = vst [vmem:[%s318 + $0x50] sm:$0xff] %v844
        %877 = vst [vmem:[%s318 + $0x58] sm:$0xff] %v845
        %878 = vst [vmem:[%s318 + $0x60] sm:$0xff] %v846
        %879 = vst [vmem:[%s318 + $0x68] sm:$0xff] %v847
        %880 = vst [vmem:[%s318 + $0x70] sm:$0xff] %v848
        %881 = vst [vmem:[%s318 + $0x78] sm:$0xff] %v849
        %v882 = vld [vmem:[#allocation7] sm:$0xff]
        %v883 = vld [vmem:[#allocation7 + $0x8] sm:$0xff]
        %v884 = vld [vmem:[#allocation7 + $0x10] sm:$0xff]
        %v885 = vld [vmem:[#allocation7 + $0x18] sm:$0xff]
        %v886 = vld [vmem:[#allocation7 + $0x20] sm:$0xff]
        %v887 = vld [vmem:[#allocation7 + $0x28] sm:$0xff]
        %v888 = vld [vmem:[#allocation7 + $0x30] sm:$0xff]
        %v889 = vld [vmem:[#allocation7 + $0x38] sm:$0xff]
        %v890 = vld [vmem:[#allocation7 + $0x40] sm:$0xff]
        %v891 = vld [vmem:[#allocation7 + $0x48] sm:$0xff]
        %v892 = vld [vmem:[#allocation7 + $0x50] sm:$0xff]
        %v893 = vld [vmem:[#allocation7 + $0x58] sm:$0xff]
        %v894 = vld [vmem:[#allocation7 + $0x60] sm:$0xff]
        %v895 = vld [vmem:[#allocation7 + $0x68] sm:$0xff]
        %v896 = vld [vmem:[#allocation7 + $0x70] sm:$0xff]
        %v897 = vld [vmem:[#allocation7 + $0x78] sm:$0xff]
        %v898 = vld [vmem:[#allocation7 + $0x80] sm:$0xff]
        %v899 = vld [vmem:[#allocation7 + $0x88] sm:$0xff]
        %v900 = vld [vmem:[#allocation7 + $0x90] sm:$0xff]
        %v901 = vld [vmem:[#allocation7 + $0x98] sm:$0xff]
        %v902 = vld [vmem:[#allocation7 + $0xa0] sm:$0xff]
        %v903 = vld [vmem:[#allocation7 + $0xa8] sm:$0xff]
        %v904 = vld [vmem:[#allocation7 + $0xb0] sm:$0xff]
        %v905 = vld [vmem:[#allocation7 + $0xb8] sm:$0xff]
        %v906 = vld [vmem:[#allocation7 + $0xc0] sm:$0xff]
        %v907 = vld [vmem:[#allocation7 + $0xc8] sm:$0xff]
        %v908 = vld [vmem:[#allocation7 + $0xd0] sm:$0xff]
        %v909 = vld [vmem:[#allocation7 + $0xd8] sm:$0xff]
        %v910 = vld [vmem:[#allocation7 + $0xe0] sm:$0xff]
        %v911 = vld [vmem:[#allocation7 + $0xe8] sm:$0xff]
        %v912 = vld [vmem:[#allocation7 + $0xf0] sm:$0xff]
        %v913 = vld [vmem:[#allocation7 + $0xf8] sm:$0xff]
        %v946 = vunpack.c.l.b16 %v882
        %v947 = vunpack.c.h.b16 %v882
        %v948 = vunpack.c.l.b16 %v883
        %v949 = vunpack.c.h.b16 %v883
        %v950 = vunpack.c.l.b16 %v884
        %v951 = vunpack.c.h.b16 %v884
        %v952 = vunpack.c.l.b16 %v885
        %v953 = vunpack.c.h.b16 %v885
        %v954 = vunpack.c.l.b16 %v886
        %v955 = vunpack.c.h.b16 %v886
        %v956 = vunpack.c.l.b16 %v887
        %v957 = vunpack.c.h.b16 %v887
        %v958 = vunpack.c.l.b16 %v888
        %v959 = vunpack.c.h.b16 %v888
        %v960 = vunpack.c.l.b16 %v889
        %v961 = vunpack.c.h.b16 %v889
        %v962 = vunpack.c.l.b16 %v890
        %v963 = vunpack.c.h.b16 %v890
        %v964 = vunpack.c.l.b16 %v891
        %v965 = vunpack.c.h.b16 %v891
        %v966 = vunpack.c.l.b16 %v892
        %v967 = vunpack.c.h.b16 %v892
        %v968 = vunpack.c.l.b16 %v893
        %v969 = vunpack.c.h.b16 %v893
        %v970 = vunpack.c.l.b16 %v894
        %v971 = vunpack.c.h.b16 %v894
        %v972 = vunpack.c.l.b16 %v895
        %v973 = vunpack.c.h.b16 %v895
        %v974 = vunpack.c.l.b16 %v896
        %v975 = vunpack.c.h.b16 %v896
        %v976 = vunpack.c.l.b16 %v897
        %v977 = vunpack.c.h.b16 %v897
        %v978 = vunpack.c.l.b16 %v898
        %v979 = vunpack.c.h.b16 %v898
        %v980 = vunpack.c.l.b16 %v899
        %v981 = vunpack.c.h.b16 %v899
        %v982 = vunpack.c.l.b16 %v900
        %v983 = vunpack.c.h.b16 %v900
        %v984 = vunpack.c.l.b16 %v901
        %v985 = vunpack.c.h.b16 %v901
        %v986 = vunpack.c.l.b16 %v902
        %v987 = vunpack.c.h.b16 %v902
        %v988 = vunpack.c.l.b16 %v903
        %v989 = vunpack.c.h.b16 %v903
        %v990 = vunpack.c.l.b16 %v904
        %v991 = vunpack.c.h.b16 %v904
        %v992 = vunpack.c.l.b16 %v905
        %v993 = vunpack.c.h.b16 %v905
        %v994 = vunpack.c.l.b16 %v906
        %v995 = vunpack.c.h.b16 %v906
        %v996 = vunpack.c.l.b16 %v907
        %v997 = vunpack.c.h.b16 %v907
        %v998 = vunpack.c.l.b16 %v908
        %v999 = vunpack.c.h.b16 %v908
        %v1000 = vunpack.c.l.b16 %v909
        %v1001 = vunpack.c.h.b16 %v909
        %v1002 = vunpack.c.l.b16 %v910
        %v1003 = vunpack.c.h.b16 %v910
        %v1004 = vunpack.c.l.b16 %v911
        %v1005 = vunpack.c.h.b16 %v911
        %v1006 = vunpack.c.l.b16 %v912
        %v1007 = vunpack.c.h.b16 %v912
        %v1008 = vunpack.c.l.b16 %v913
        %v1009 = vunpack.c.h.b16 %v913
        %v1010 = vpack.c.b16 %v948, %v946
        %v1011 = vpack.c.b16 %v949, %v947
        %v1012 = vpack.c.b16 %v952, %v950
        %v1013 = vpack.c.b16 %v953, %v951
        %v1014 = vpack.c.b16 %v956, %v954
        %v1015 = vpack.c.b16 %v957, %v955
        %v1016 = vpack.c.b16 %v960, %v958
        %v1017 = vpack.c.b16 %v961, %v959
        %v1018 = vpack.c.b16 %v964, %v962
        %v1019 = vpack.c.b16 %v965, %v963
        %v1020 = vpack.c.b16 %v968, %v966
        %v1021 = vpack.c.b16 %v969, %v967
        %v1022 = vpack.c.b16 %v972, %v970
        %v1023 = vpack.c.b16 %v973, %v971
        %v1024 = vpack.c.b16 %v976, %v974
        %v1025 = vpack.c.b16 %v977, %v975
        %v1026 = vpack.c.b16 %v980, %v978
        %v1027 = vpack.c.b16 %v981, %v979
        %v1028 = vpack.c.b16 %v984, %v982
        %v1029 = vpack.c.b16 %v985, %v983
        %v1030 = vpack.c.b16 %v988, %v986
        %v1031 = vpack.c.b16 %v989, %v987
        %v1032 = vpack.c.b16 %v992, %v990
        %v1033 = vpack.c.b16 %v993, %v991
        %v1034 = vpack.c.b16 %v996, %v994
        %v1035 = vpack.c.b16 %v997, %v995
        %v1036 = vpack.c.b16 %v1000, %v998
        %v1037 = vpack.c.b16 %v1001, %v999
        %v1038 = vpack.c.b16 %v1004, %v1002
        %v1039 = vpack.c.b16 %v1005, %v1003
        %v1040 = vpack.c.b16 %v1008, %v1006
        %v1041 = vpack.c.b16 %v1009, %v1007
        %1074 = vmatprep.subr.bf16.mxu0 %v1011
        %1075 = vmatpush1.bf16.msra.mxu0 %v1010
        %1076 = vmatprep.subr.bf16.mxu0 %v1013
        %1077 = vmatpush1.bf16.msra.mxu0 %v1012
        %1078 = vmatprep.subr.bf16.mxu0 %v1015
        %1079 = vmatpush1.bf16.msra.mxu0 %v1014
        %1080 = vmatprep.subr.bf16.mxu0 %v1017
        %1081 = vmatpush1.bf16.msra.mxu0 %v1016
        %1082 = vmatprep.subr.bf16.mxu0 %v1019
        %1083 = vmatpush1.bf16.msra.mxu0 %v1018
        %1084 = vmatprep.subr.bf16.mxu0 %v1021
        %1085 = vmatpush1.bf16.msra.mxu0 %v1020
        %1086 = vmatprep.subr.bf16.mxu0 %v1023
        %1087 = vmatpush1.bf16.msra.mxu0 %v1022
        %1088 = vmatprep.subr.bf16.mxu0 %v1025
        %1089 = vmatpush1.bf16.msra.mxu0 %v1024
        %1090 = vmatprep.subr.bf16.mxu0 %v1027
        %1091 = vmatpush1.bf16.msra.mxu0 %v1026
        %1092 = vmatprep.subr.bf16.mxu0 %v1029
        %1093 = vmatpush1.bf16.msra.mxu0 %v1028
        %1094 = vmatprep.subr.bf16.mxu0 %v1031
        %1095 = vmatpush1.bf16.msra.mxu0 %v1030
        %1096 = vmatprep.subr.bf16.mxu0 %v1033
        %1097 = vmatpush1.bf16.msra.mxu0 %v1032
        %1098 = vmatprep.subr.bf16.mxu0 %v1035
        %1099 = vmatpush1.bf16.msra.mxu0 %v1034
        %1100 = vmatprep.subr.bf16.mxu0 %v1037
        %1101 = vmatpush1.bf16.msra.mxu0 %v1036
        %1102 = vmatprep.subr.bf16.mxu0 %v1039
        %1103 = vmatpush1.bf16.msra.mxu0 %v1038
        %1104 = vmatprep.subr.bf16.mxu0 %v1041
        %1105 = vmatpush1.bf16.msra.mxu0 %v1040
        %1106 = vmatprep.mubr.bf16.mxu0 %v434
        %1107 = vmatmul.mubr.bf16.gmra.mrb[0].mxu0 %v433
        %v1108 = vpop.f32.mrb[0].mxu0
        %v1109 = vadd.f32 0.0, %v1108
        %v1110 = vpop.f32.mrb[0].mxu0
        %v1111 = vadd.f32 0.0, %v1110
        %v1112 = vpop.f32.mrb[0].mxu0
        %v1113 = vadd.f32 0.0, %v1112
        %v1114 = vpop.f32.mrb[0].mxu0
        %v1115 = vadd.f32 0.0, %v1114
        %1116 = vmatprep.mubr.bf16.mxu0 %v436
        %1117 = vmatmul.mubr.bf16.gmra.mrb[0].mxu0 %v435
        %v1118 = vpop.f32.mrb[0].mxu0
        %v1119 = vadd.f32 0.0, %v1118
        %v1120 = vpop.f32.mrb[0].mxu0
        %v1121 = vadd.f32 0.0, %v1120
        %v1122 = vpop.f32.mrb[0].mxu0
        %v1123 = vadd.f32 0.0, %v1122
        %v1124 = vpop.f32.mrb[0].mxu0
        %v1125 = vadd.f32 0.0, %v1124
        %1126 = vmatprep.mubr.bf16.mxu0 %v438
        %1127 = vmatmul.mubr.bf16.gmra.mrb[0].mxu0 %v437
        %v1128 = vpop.f32.mrb[0].mxu0
        %v1129 = vadd.f32 0.0, %v1128
        %v1130 = vpop.f32.mrb[0].mxu0
        %v1131 = vadd.f32 0.0, %v1130
        %v1132 = vpop.f32.mrb[0].mxu0
        %v1133 = vadd.f32 0.0, %v1132
        %v1134 = vpop.f32.mrb[0].mxu0
        %v1135 = vadd.f32 0.0, %v1134
        %1136 = vmatprep.mubr.bf16.mxu0 %v440
        %1137 = vmatmul.mubr.bf16.gmra.mrb[0].mxu0 %v439
        %v1138 = vpop.f32.mrb[0].mxu0
        %v1139 = vadd.f32 0.0, %v1138
        %v1140 = vpop.f32.mrb[0].mxu0
        %v1141 = vadd.f32 0.0, %v1140
        %v1142 = vpop.f32.mrb[0].mxu0
        %v1143 = vadd.f32 0.0, %v1142
        %v1144 = vpop.f32.mrb[0].mxu0
        %v1145 = vadd.f32 0.0, %v1144
        %1146 = vmatprep.mubr.bf16.mxu0 %v442
        %1147 = vmatmul.mubr.bf16.gmra.mrb[0].mxu0 %v441
        %v1148 = vpop.f32.mrb[0].mxu0
        %v1149 = vadd.f32 0.0, %v1148
        %v1150 = vpop.f32.mrb[0].mxu0
        %v1151 = vadd.f32 0.0, %v1150
        %v1152 = vpop.f32.mrb[0].mxu0
        %v1153 = vadd.f32 0.0, %v1152
        %v1154 = vpop.f32.mrb[0].mxu0
        %v1155 = vadd.f32 0.0, %v1154
        %1156 = vmatprep.mubr.bf16.mxu0 %v444
        %1157 = vmatmul.mubr.bf16.gmra.mrb[0].mxu0 %v443
        %v1158 = vpop.f32.mrb[0].mxu0
        %v1159 = vadd.f32 0.0, %v1158
        %v1160 = vpop.f32.mrb[0].mxu0
        %v1161 = vadd.f32 0.0, %v1160
        %v1162 = vpop.f32.mrb[0].mxu0
        %v1163 = vadd.f32 0.0, %v1162
        %v1164 = vpop.f32.mrb[0].mxu0
        %v1165 = vadd.f32 0.0, %v1164
        %1166 = vmatprep.mubr.bf16.mxu0 %v446
        %1167 = vmatmul.mubr.bf16.gmra.mrb[0].mxu0 %v445
        %v1168 = vpop.f32.mrb[0].mxu0
        %v1169 = vadd.f32 0.0, %v1168
        %v1170 = vpop.f32.mrb[0].mxu0
        %v1171 = vadd.f32 0.0, %v1170
        %v1172 = vpop.f32.mrb[0].mxu0
        %v1173 = vadd.f32 0.0, %v1172
        %v1174 = vpop.f32.mrb[0].mxu0
        %v1175 = vadd.f32 0.0, %v1174
        %1176 = vmatprep.mubr.bf16.mxu0 %v448
        %1177 = vmatmul.mubr.bf16.gmra.mrb[0].mxu0 %v447
        %v1178 = vpop.f32.mrb[0].mxu0
        %v1179 = vadd.f32 0.0, %v1178
        %v1180 = vpop.f32.mrb[0].mxu0
        %v1181 = vadd.f32 0.0, %v1180
        %v1182 = vpop.f32.mrb[0].mxu0
        %v1183 = vadd.f32 0.0, %v1182
        %v1184 = vpop.f32.mrb[0].mxu0
        %v1185 = vadd.f32 0.0, %v1184
        %1186 = vdwg.mxu0
        %v1187 = vpack.c.bf16 %v1113, %v1109
        %v1188 = vpack.c.bf16 %v1115, %v1111
        %v1189 = vpack.c.bf16 %v1123, %v1119
        %v1190 = vpack.c.bf16 %v1125, %v1121
        %v1191 = vpack.c.bf16 %v1133, %v1129
        %v1192 = vpack.c.bf16 %v1135, %v1131
        %v1193 = vpack.c.bf16 %v1143, %v1139
        %v1194 = vpack.c.bf16 %v1145, %v1141
        %v1195 = vpack.c.bf16 %v1153, %v1149
        %v1196 = vpack.c.bf16 %v1155, %v1151
        %v1197 = vpack.c.bf16 %v1163, %v1159
        %v1198 = vpack.c.bf16 %v1165, %v1161
        %v1199 = vpack.c.bf16 %v1173, %v1169
        %v1200 = vpack.c.bf16 %v1175, %v1171
        %v1201 = vpack.c.bf16 %v1183, %v1179
        %v1202 = vpack.c.bf16 %v1185, %v1181
        %v1219 = vunpack.c.l.b16 %v1187
        %v1220 = vunpack.c.l.b16 %v1188
        %v1221 = vunpack.c.h.b16 %v1187
        %v1222 = vunpack.c.h.b16 %v1188
        %v1223 = vunpack.c.l.b16 %v1189
        %v1224 = vunpack.c.l.b16 %v1190
        %v1225 = vunpack.c.h.b16 %v1189
        %v1226 = vunpack.c.h.b16 %v1190
        %v1227 = vunpack.c.l.b16 %v1191
        %v1228 = vunpack.c.l.b16 %v1192
        %v1229 = vunpack.c.h.b16 %v1191
        %v1230 = vunpack.c.h.b16 %v1192
        %v1231 = vunpack.c.l.b16 %v1193
        %v1232 = vunpack.c.l.b16 %v1194
        %v1233 = vunpack.c.h.b16 %v1193
        %v1234 = vunpack.c.h.b16 %v1194
        %v1235 = vunpack.c.l.b16 %v1195
        %v1236 = vunpack.c.l.b16 %v1196
        %v1237 = vunpack.c.h.b16 %v1195
        %v1238 = vunpack.c.h.b16 %v1196
        %v1239 = vunpack.c.l.b16 %v1197
        %v1240 = vunpack.c.l.b16 %v1198
        %v1241 = vunpack.c.h.b16 %v1197
        %v1242 = vunpack.c.h.b16 %v1198
        %v1243 = vunpack.c.l.b16 %v1199
        %v1244 = vunpack.c.l.b16 %v1200
        %v1245 = vunpack.c.h.b16 %v1199
        %v1246 = vunpack.c.h.b16 %v1200
        %v1247 = vunpack.c.l.b16 %v1201
        %v1248 = vunpack.c.l.b16 %v1202
        %v1249 = vunpack.c.h.b16 %v1201
        %v1250 = vunpack.c.h.b16 %v1202
        %v1251 = vpack.c.b16 %v1220, %v1219
        %v1252 = vpack.c.b16 %v1222, %v1221
        %v1253 = vpack.c.b16 %v1224, %v1223
        %v1254 = vpack.c.b16 %v1226, %v1225
        %v1255 = vpack.c.b16 %v1228, %v1227
        %v1256 = vpack.c.b16 %v1230, %v1229
        %v1257 = vpack.c.b16 %v1232, %v1231
        %v1258 = vpack.c.b16 %v1234, %v1233
        %v1259 = vpack.c.b16 %v1236, %v1235
        %v1260 = vpack.c.b16 %v1238, %v1237
        %v1261 = vpack.c.b16 %v1240, %v1239
        %v1262 = vpack.c.b16 %v1242, %v1241
        %v1263 = vpack.c.b16 %v1244, %v1243
        %v1264 = vpack.c.b16 %v1246, %v1245
        %v1265 = vpack.c.b16 %v1248, %v1247
        %v1266 = vpack.c.b16 %v1250, %v1249
        %1283 = vst [vmem:[%s325] sm:$0xff] %v1251
        %1284 = vst [vmem:[%s325 + $0x8] sm:$0xff] %v1252
        %1285 = vst [vmem:[%s325 + $0x10] sm:$0xff] %v1253
        %1286 = vst [vmem:[%s325 + $0x18] sm:$0xff] %v1254
        %1287 = vst [vmem:[%s325 + $0x20] sm:$0xff] %v1255
        %1288 = vst [vmem:[%s325 + $0x28] sm:$0xff] %v1256
        %1289 = vst [vmem:[%s325 + $0x30] sm:$0xff] %v1257
        %1290 = vst [vmem:[%s325 + $0x38] sm:$0xff] %v1258
        %1291 = vst [vmem:[%s325 + $0x40] sm:$0xff] %v1259
        %1292 = vst [vmem:[%s325 + $0x48] sm:$0xff] %v1260
        %1293 = vst [vmem:[%s325 + $0x50] sm:$0xff] %v1261
        %1294 = vst [vmem:[%s325 + $0x58] sm:$0xff] %v1262
        %1295 = vst [vmem:[%s325 + $0x60] sm:$0xff] %v1263
        %1296 = vst [vmem:[%s325 + $0x68] sm:$0xff] %v1264
        %1297 = vst [vmem:[%s325 + $0x70] sm:$0xff] %v1265
        %1298 = vst [vmem:[%s325 + $0x78] sm:$0xff] %v1266
        %v1299 = vld [vmem:[#allocation8] sm:$0xff]
        %v1300 = vld [vmem:[#allocation8 + $0x8] sm:$0xff]
        %v1301 = vld [vmem:[#allocation8 + $0x10] sm:$0xff]
        %v1302 = vld [vmem:[#allocation8 + $0x18] sm:$0xff]
        %v1303 = vld [vmem:[#allocation8 + $0x20] sm:$0xff]
        %v1304 = vld [vmem:[#allocation8 + $0x28] sm:$0xff]
        %v1305 = vld [vmem:[#allocation8 + $0x30] sm:$0xff]
        %v1306 = vld [vmem:[#allocation8 + $0x38] sm:$0xff]
        %v1307 = vld [vmem:[#allocation8 + $0x40] sm:$0xff]
        %v1308 = vld [vmem:[#allocation8 + $0x48] sm:$0xff]
        %v1309 = vld [vmem:[#allocation8 + $0x50] sm:$0xff]
        %v1310 = vld [vmem:[#allocation8 + $0x58] sm:$0xff]
        %v1311 = vld [vmem:[#allocation8 + $0x60] sm:$0xff]
        %v1312 = vld [vmem:[#allocation8 + $0x68] sm:$0xff]
        %v1313 = vld [vmem:[#allocation8 + $0x70] sm:$0xff]
        %v1314 = vld [vmem:[#allocation8 + $0x78] sm:$0xff]
        %v1315 = vld [vmem:[#allocation8 + $0x80] sm:$0xff]
        %v1316 = vld [vmem:[#allocation8 + $0x88] sm:$0xff]
        %v1317 = vld [vmem:[#allocation8 + $0x90] sm:$0xff]
        %v1318 = vld [vmem:[#allocation8 + $0x98] sm:$0xff]
        %v1319 = vld [vmem:[#allocation8 + $0xa0] sm:$0xff]
        %v1320 = vld [vmem:[#allocation8 + $0xa8] sm:$0xff]
        %v1321 = vld [vmem:[#allocation8 + $0xb0] sm:$0xff]
        %v1322 = vld [vmem:[#allocation8 + $0xb8] sm:$0xff]
        %v1323 = vld [vmem:[#allocation8 + $0xc0] sm:$0xff]
        %v1324 = vld [vmem:[#allocation8 + $0xc8] sm:$0xff]
        %v1325 = vld [vmem:[#allocation8 + $0xd0] sm:$0xff]
        %v1326 = vld [vmem:[#allocation8 + $0xd8] sm:$0xff]
        %v1327 = vld [vmem:[#allocation8 + $0xe0] sm:$0xff]
        %v1328 = vld [vmem:[#allocation8 + $0xe8] sm:$0xff]
        %v1329 = vld [vmem:[#allocation8 + $0xf0] sm:$0xff]
        %v1330 = vld [vmem:[#allocation8 + $0xf8] sm:$0xff]
        %v1363 = vunpack.c.l.b16 %v1299
        %v1364 = vunpack.c.h.b16 %v1299
        %v1365 = vunpack.c.l.b16 %v1300
        %v1366 = vunpack.c.h.b16 %v1300
        %v1367 = vunpack.c.l.b16 %v1301
        %v1368 = vunpack.c.h.b16 %v1301
        %v1369 = vunpack.c.l.b16 %v1302
        %v1370 = vunpack.c.h.b16 %v1302
        %v1371 = vunpack.c.l.b16 %v1303
        %v1372 = vunpack.c.h.b16 %v1303
        %v1373 = vunpack.c.l.b16 %v1304
        %v1374 = vunpack.c.h.b16 %v1304
        %v1375 = vunpack.c.l.b16 %v1305
        %v1376 = vunpack.c.h.b16 %v1305
        %v1377 = vunpack.c.l.b16 %v1306
        %v1378 = vunpack.c.h.b16 %v1306
        %v1379 = vunpack.c.l.b16 %v1307
        %v1380 = vunpack.c.h.b16 %v1307
        %v1381 = vunpack.c.l.b16 %v1308
        %v1382 = vunpack.c.h.b16 %v1308
        %v1383 = vunpack.c.l.b16 %v1309
        %v1384 = vunpack.c.h.b16 %v1309
        %v1385 = vunpack.c.l.b16 %v1310
        %v1386 = vunpack.c.h.b16 %v1310
        %v1387 = vunpack.c.l.b16 %v1311
        %v1388 = vunpack.c.h.b16 %v1311
        %v1389 = vunpack.c.l.b16 %v1312
        %v1390 = vunpack.c.h.b16 %v1312
        %v1391 = vunpack.c.l.b16 %v1313
        %v1392 = vunpack.c.h.b16 %v1313
        %v1393 = vunpack.c.l.b16 %v1314
        %v1394 = vunpack.c.h.b16 %v1314
        %v1395 = vunpack.c.l.b16 %v1315
        %v1396 = vunpack.c.h.b16 %v1315
        %v1397 = vunpack.c.l.b16 %v1316
        %v1398 = vunpack.c.h.b16 %v1316
        %v1399 = vunpack.c.l.b16 %v1317
        %v1400 = vunpack.c.h.b16 %v1317
        %v1401 = vunpack.c.l.b16 %v1318
        %v1402 = vunpack.c.h.b16 %v1318
        %v1403 = vunpack.c.l.b16 %v1319
        %v1404 = vunpack.c.h.b16 %v1319
        %v1405 = vunpack.c.l.b16 %v1320
        %v1406 = vunpack.c.h.b16 %v1320
        %v1407 = vunpack.c.l.b16 %v1321
        %v1408 = vunpack.c.h.b16 %v1321
        %v1409 = vunpack.c.l.b16 %v1322
        %v1410 = vunpack.c.h.b16 %v1322
        %v1411 = vunpack.c.l.b16 %v1323
        %v1412 = vunpack.c.h.b16 %v1323
        %v1413 = vunpack.c.l.b16 %v1324
        %v1414 = vunpack.c.h.b16 %v1324
        %v1415 = vunpack.c.l.b16 %v1325
        %v1416 = vunpack.c.h.b16 %v1325
        %v1417 = vunpack.c.l.b16 %v1326
        %v1418 = vunpack.c.h.b16 %v1326
        %v1419 = vunpack.c.l.b16 %v1327
        %v1420 = vunpack.c.h.b16 %v1327
        %v1421 = vunpack.c.l.b16 %v1328
        %v1422 = vunpack.c.h.b16 %v1328
        %v1423 = vunpack.c.l.b16 %v1329
        %v1424 = vunpack.c.h.b16 %v1329
        %v1425 = vunpack.c.l.b16 %v1330
        %v1426 = vunpack.c.h.b16 %v1330
        %v1427 = vpack.c.b16 %v1365, %v1363
        %v1428 = vpack.c.b16 %v1366, %v1364
        %v1429 = vpack.c.b16 %v1369, %v1367
        %v1430 = vpack.c.b16 %v1370, %v1368
        %v1431 = vpack.c.b16 %v1373, %v1371
        %v1432 = vpack.c.b16 %v1374, %v1372
        %v1433 = vpack.c.b16 %v1377, %v1375
        %v1434 = vpack.c.b16 %v1378, %v1376
        %v1435 = vpack.c.b16 %v1381, %v1379
        %v1436 = vpack.c.b16 %v1382, %v1380
        %v1437 = vpack.c.b16 %v1385, %v1383
        %v1438 = vpack.c.b16 %v1386, %v1384
        %v1439 = vpack.c.b16 %v1389, %v1387
        %v1440 = vpack.c.b16 %v1390, %v1388
        %v1441 = vpack.c.b16 %v1393, %v1391
        %v1442 = vpack.c.b16 %v1394, %v1392
        %v1443 = vpack.c.b16 %v1397, %v1395
        %v1444 = vpack.c.b16 %v1398, %v1396
        %v1445 = vpack.c.b16 %v1401, %v1399
        %v1446 = vpack.c.b16 %v1402, %v1400
        %v1447 = vpack.c.b16 %v1405, %v1403
        %v1448 = vpack.c.b16 %v1406, %v1404
        %v1449 = vpack.c.b16 %v1409, %v1407
        %v1450 = vpack.c.b16 %v1410, %v1408
        %v1451 = vpack.c.b16 %v1413, %v1411
        %v1452 = vpack.c.b16 %v1414, %v1412
        %v1453 = vpack.c.b16 %v1417, %v1415
        %v1454 = vpack.c.b16 %v1418, %v1416
        %v1455 = vpack.c.b16 %v1421, %v1419
        %v1456 = vpack.c.b16 %v1422, %v1420
        %v1457 = vpack.c.b16 %v1425, %v1423
        %v1458 = vpack.c.b16 %v1426, %v1424
        %1491 = vmatprep.subr.bf16.mxu0 %v1428
        %1492 = vmatpush1.bf16.msra.mxu0 %v1427
        %1493 = vmatprep.subr.bf16.mxu0 %v1430
        %1494 = vmatpush1.bf16.msra.mxu0 %v1429
        %1495 = vmatprep.subr.bf16.mxu0 %v1432
        %1496 = vmatpush1.bf16.msra.mxu0 %v1431
        %1497 = vmatprep.subr.bf16.mxu0 %v1434
        %1498 = vmatpush1.bf16.msra.mxu0 %v1433
        %1499 = vmatprep.subr.bf16.mxu0 %v1436
        %1500 = vmatpush1.bf16.msra.mxu0 %v1435
        %1501 = vmatprep.subr.bf16.mxu0 %v1438
        %1502 = vmatpush1.bf16.msra.mxu0 %v1437
        %1503 = vmatprep.subr.bf16.mxu0 %v1440
        %1504 = vmatpush1.bf16.msra.mxu0 %v1439
        %1505 = vmatprep.subr.bf16.mxu0 %v1442
        %1506 = vmatpush1.bf16.msra.mxu0 %v1441
        %1507 = vmatprep.subr.bf16.mxu0 %v1444
        %1508 = vmatpush1.bf16.msra.mxu0 %v1443
        %1509 = vmatprep.subr.bf16.mxu0 %v1446
        %1510 = vmatpush1.bf16.msra.mxu0 %v1445
        %1511 = vmatprep.subr.bf16.mxu0 %v1448
        %1512 = vmatpush1.bf16.msra.mxu0 %v1447
        %1513 = vmatprep.subr.bf16.mxu0 %v1450
        %1514 = vmatpush1.bf16.msra.mxu0 %v1449
        %1515 = vmatprep.subr.bf16.mxu0 %v1452
        %1516 = vmatpush1.bf16.msra.mxu0 %v1451
        %1517 = vmatprep.subr.bf16.mxu0 %v1454
        %1518 = vmatpush1.bf16.msra.mxu0 %v1453
        %1519 = vmatprep.subr.bf16.mxu0 %v1456
        %1520 = vmatpush1.bf16.msra.mxu0 %v1455
        %1521 = vmatprep.subr.bf16.mxu0 %v1458
        %1522 = vmatpush1.bf16.msra.mxu0 %v1457
        %1523 = vmatprep.mubr.bf16.mxu0 %v434
        %1524 = vmatmul.mubr.bf16.gmra.mrb[0].mxu0 %v433
        %v1525 = vpop.f32.mrb[0].mxu0
        %v1526 = vadd.f32 0.0, %v1525
        %v1527 = vpop.f32.mrb[0].mxu0
        %v1528 = vadd.f32 0.0, %v1527
        %v1529 = vpop.f32.mrb[0].mxu0
        %v1530 = vadd.f32 0.0, %v1529
        %v1531 = vpop.f32.mrb[0].mxu0
        %v1532 = vadd.f32 0.0, %v1531
        %1533 = vmatprep.mubr.bf16.mxu0 %v436
        %1534 = vmatmul.mubr.bf16.gmra.mrb[0].mxu0 %v435
        %v1535 = vpop.f32.mrb[0].mxu0
        %v1536 = vadd.f32 0.0, %v1535
        %v1537 = vpop.f32.mrb[0].mxu0
        %v1538 = vadd.f32 0.0, %v1537
        %v1539 = vpop.f32.mrb[0].mxu0
        %v1540 = vadd.f32 0.0, %v1539
        %v1541 = vpop.f32.mrb[0].mxu0
        %v1542 = vadd.f32 0.0, %v1541
        %1543 = vmatprep.mubr.bf16.mxu0 %v438
        %1544 = vmatmul.mubr.bf16.gmra.mrb[0].mxu0 %v437
        %v1545 = vpop.f32.mrb[0].mxu0
        %v1546 = vadd.f32 0.0, %v1545
        %v1547 = vpop.f32.mrb[0].mxu0
        %v1548 = vadd.f32 0.0, %v1547
        %v1549 = vpop.f32.mrb[0].mxu0
        %v1550 = vadd.f32 0.0, %v1549
        %v1551 = vpop.f32.mrb[0].mxu0
        %v1552 = vadd.f32 0.0, %v1551
        %1553 = vmatprep.mubr.bf16.mxu0 %v440
        %1554 = vmatmul.mubr.bf16.gmra.mrb[0].mxu0 %v439
        %v1555 = vpop.f32.mrb[0].mxu0
        %v1556 = vadd.f32 0.0, %v1555
        %v1557 = vpop.f32.mrb[0].mxu0
        %v1558 = vadd.f32 0.0, %v1557
        %v1559 = vpop.f32.mrb[0].mxu0
        %v1560 = vadd.f32 0.0, %v1559
        %v1561 = vpop.f32.mrb[0].mxu0
        %v1562 = vadd.f32 0.0, %v1561
        %1563 = vmatprep.mubr.bf16.mxu0 %v442
        %1564 = vmatmul.mubr.bf16.gmra.mrb[0].mxu0 %v441
        %v1565 = vpop.f32.mrb[0].mxu0
        %v1566 = vadd.f32 0.0, %v1565
        %v1567 = vpop.f32.mrb[0].mxu0
        %v1568 = vadd.f32 0.0, %v1567
        %v1569 = vpop.f32.mrb[0].mxu0
        %v1570 = vadd.f32 0.0, %v1569
        %v1571 = vpop.f32.mrb[0].mxu0
        %v1572 = vadd.f32 0.0, %v1571
        %1573 = vmatprep.mubr.bf16.mxu0 %v444
        %1574 = vmatmul.mubr.bf16.gmra.mrb[0].mxu0 %v443
        %v1575 = vpop.f32.mrb[0].mxu0
        %v1576 = vadd.f32 0.0, %v1575
        %v1577 = vpop.f32.mrb[0].mxu0
        %v1578 = vadd.f32 0.0, %v1577
        %v1579 = vpop.f32.mrb[0].mxu0
        %v1580 = vadd.f32 0.0, %v1579
        %v1581 = vpop.f32.mrb[0].mxu0
        %v1582 = vadd.f32 0.0, %v1581
        %1583 = vmatprep.mubr.bf16.mxu0 %v446
        %1584 = vmatmul.mubr.bf16.gmra.mrb[0].mxu0 %v445
        %v1585 = vpop.f32.mrb[0].mxu0
        %v1586 = vadd.f32 0.0, %v1585
        %v1587 = vpop.f32.mrb[0].mxu0
        %v1588 = vadd.f32 0.0, %v1587
        %v1589 = vpop.f32.mrb[0].mxu0
        %v1590 = vadd.f32 0.0, %v1589
        %v1591 = vpop.f32.mrb[0].mxu0
        %v1592 = vadd.f32 0.0, %v1591
        %1593 = vmatprep.mubr.bf16.mxu0 %v448
        %1594 = vmatmul.mubr.bf16.gmra.mrb[0].mxu0 %v447
        %v1595 = vpop.f32.mrb[0].mxu0
        %v1596 = vadd.f32 0.0, %v1595
        %v1597 = vpop.f32.mrb[0].mxu0
        %v1598 = vadd.f32 0.0, %v1597
        %v1599 = vpop.f32.mrb[0].mxu0
        %v1600 = vadd.f32 0.0, %v1599
        %v1601 = vpop.f32.mrb[0].mxu0
        %v1602 = vadd.f32 0.0, %v1601
        %1603 = vdwg.mxu0
        %v1604 = vpack.c.bf16 %v1530, %v1526
        %v1605 = vpack.c.bf16 %v1532, %v1528
        %v1606 = vpack.c.bf16 %v1540, %v1536
        %v1607 = vpack.c.bf16 %v1542, %v1538
        %v1608 = vpack.c.bf16 %v1550, %v1546
        %v1609 = vpack.c.bf16 %v1552, %v1548
        %v1610 = vpack.c.bf16 %v1560, %v1556
        %v1611 = vpack.c.bf16 %v1562, %v1558
        %v1612 = vpack.c.bf16 %v1570, %v1566
        %v1613 = vpack.c.bf16 %v1572, %v1568
        %v1614 = vpack.c.bf16 %v1580, %v1576
        %v1615 = vpack.c.bf16 %v1582, %v1578
        %v1616 = vpack.c.bf16 %v1590, %v1586
        %v1617 = vpack.c.bf16 %v1592, %v1588
        %v1618 = vpack.c.bf16 %v1600, %v1596
        %v1619 = vpack.c.bf16 %v1602, %v1598
        %v1636 = vunpack.c.l.b16 %v1604
        %v1637 = vunpack.c.l.b16 %v1605
        %v1638 = vunpack.c.h.b16 %v1604
        %v1639 = vunpack.c.h.b16 %v1605
        %v1640 = vunpack.c.l.b16 %v1606
        %v1641 = vunpack.c.l.b16 %v1607
        %v1642 = vunpack.c.h.b16 %v1606
        %v1643 = vunpack.c.h.b16 %v1607
        %v1644 = vunpack.c.l.b16 %v1608
        %v1645 = vunpack.c.l.b16 %v1609
        %v1646 = vunpack.c.h.b16 %v1608
        %v1647 = vunpack.c.h.b16 %v1609
        %v1648 = vunpack.c.l.b16 %v1610
        %v1649 = vunpack.c.l.b16 %v1611
        %v1650 = vunpack.c.h.b16 %v1610
        %v1651 = vunpack.c.h.b16 %v1611
        %v1652 = vunpack.c.l.b16 %v1612
        %v1653 = vunpack.c.l.b16 %v1613
        %v1654 = vunpack.c.h.b16 %v1612
        %v1655 = vunpack.c.h.b16 %v1613
        %v1656 = vunpack.c.l.b16 %v1614
        %v1657 = vunpack.c.l.b16 %v1615
        %v1658 = vunpack.c.h.b16 %v1614
        %v1659 = vunpack.c.h.b16 %v1615
        %v1660 = vunpack.c.l.b16 %v1616
        %v1661 = vunpack.c.l.b16 %v1617
        %v1662 = vunpack.c.h.b16 %v1616
        %v1663 = vunpack.c.h.b16 %v1617
        %v1664 = vunpack.c.l.b16 %v1618
        %v1665 = vunpack.c.l.b16 %v1619
        %v1666 = vunpack.c.h.b16 %v1618
        %v1667 = vunpack.c.h.b16 %v1619
        %v1668 = vpack.c.b16 %v1637, %v1636
        %v1669 = vpack.c.b16 %v1639, %v1638
        %v1670 = vpack.c.b16 %v1641, %v1640
        %v1671 = vpack.c.b16 %v1643, %v1642
        %v1672 = vpack.c.b16 %v1645, %v1644
        %v1673 = vpack.c.b16 %v1647, %v1646
        %v1674 = vpack.c.b16 %v1649, %v1648
        %v1675 = vpack.c.b16 %v1651, %v1650
        %v1676 = vpack.c.b16 %v1653, %v1652
        %v1677 = vpack.c.b16 %v1655, %v1654
        %v1678 = vpack.c.b16 %v1657, %v1656
        %v1679 = vpack.c.b16 %v1659, %v1658
        %v1680 = vpack.c.b16 %v1661, %v1660
        %v1681 = vpack.c.b16 %v1663, %v1662
        %v1682 = vpack.c.b16 %v1665, %v1664
        %v1683 = vpack.c.b16 %v1667, %v1666
        %1700 = vst [vmem:[%s332] sm:$0xff] %v1668
        %1701 = vst [vmem:[%s332 + $0x8] sm:$0xff] %v1669
        %1702 = vst [vmem:[%s332 + $0x10] sm:$0xff] %v1670
        %1703 = vst [vmem:[%s332 + $0x18] sm:$0xff] %v1671
        %1704 = vst [vmem:[%s332 + $0x20] sm:$0xff] %v1672
        %1705 = vst [vmem:[%s332 + $0x28] sm:$0xff] %v1673
        %1706 = vst [vmem:[%s332 + $0x30] sm:$0xff] %v1674
        %1707 = vst [vmem:[%s332 + $0x38] sm:$0xff] %v1675
        %1708 = vst [vmem:[%s332 + $0x40] sm:$0xff] %v1676
        %1709 = vst [vmem:[%s332 + $0x48] sm:$0xff] %v1677
        %1710 = vst [vmem:[%s332 + $0x50] sm:$0xff] %v1678
        %1711 = vst [vmem:[%s332 + $0x58] sm:$0xff] %v1679
        %1712 = vst [vmem:[%s332 + $0x60] sm:$0xff] %v1680
        %1713 = vst [vmem:[%s332 + $0x68] sm:$0xff] %v1681
        %1714 = vst [vmem:[%s332 + $0x70] sm:$0xff] %v1682
        %1715 = vst [vmem:[%s332 + $0x78] sm:$0xff] %v1683
        %s1716 = sand.u32 %s126, 1
        %s1717 = scalar_lea.sflag [#allocation4], %s1716
        %s1718 = sand.u32 %s126, 1
        %s1719 = smul.addr %s1718, 128
        %s1720 = scalar_lea.vmem [#allocation10], %s1719
        %s1721 = sand.u32 %s29, 1
        %s1722 = scalar_lea.sflag [#allocation12], %s1721
        %s1723 = sand.u32 %s152, 1
        %s1724 = smul.addr %s1723, 128
        %s1725 = scalar_lea.vmem [#allocation11], %s1724
        %s1726 = sand.u32 %s29, 1
        %s1727 = scalar_lea.sflag [#allocation12], %s1726
        %s1728 = sand.u32 %s178, 1
        %s1729 = smul.addr %s1728, 128
        %s1730 = scalar_lea.vmem [#allocation13], %s1729
        // Predicated region
        $region53: #{tpu_custom_call.1} parent=35 // pred_check
          %p1731 = pneg %p136
        $region54: #{tpu_custom_call.1} parent=35 // pred_check_branch
          %1733 = sbr.rel (%p1731) target = $region56
        $region55: #{tpu_custom_call.1} parent=35 // pred_region
          %s1734 = smul.u32 16, %s29
          %s1736 = ssub.s32 2048, 2048
          %1737 = vsyncadd %s1717, %s1736
          %s1738 = smul.addr %s1734, 2
          %s1739 = smul.addr %s1738, 64
          %s1740 = scalar_lea.hbm %s4, %s1739
          %s1741 = sshll.u32 %s1720, 4
          %s1742 = int_to_ptr.vmem [resolvable:$true] %s1741
          %1747 = dma.vmem_to_hbm [thread:$0]  %s1742, 2048, %s1740, %s1717, 128, 128, 8
        $region56: #{tpu_custom_call.1} parent=35 // pred_fallthru
          _
        // Predicated region
        $region57: #{tpu_custom_call.1} parent=35 // pred_check
          %p1748 = pneg %p162
        $region58: #{tpu_custom_call.1} parent=35 // pred_check_branch
          %1750 = sbr.rel (%p1748) target = $region60
        $region59: #{tpu_custom_call.1} parent=35 // pred_region
          %s1751 = smul.u32 16, %s29
          %s1753 = ssub.s32 2048, 2048
          %1754 = vsyncadd %s1722, %s1753
          %s1755 = smul.addr %s1751, 2
          %s1756 = smul.addr %s1755, 64
          %s1757 = scalar_lea.hbm %s5, %s1756
          %s1758 = sshll.u32 %s1725, 4
          %s1759 = int_to_ptr.vmem [resolvable:$true] %s1758
          %1764 = dma.vmem_to_hbm [thread:$0]  %s1759, 2048, %s1757, %s1722, 128, 128, 8
        $region60: #{tpu_custom_call.1} parent=35 // pred_fallthru
          _
        // Predicated region
        $region61: #{tpu_custom_call.1} parent=35 // pred_check
          %p1765 = pneg %p188
        $region62: #{tpu_custom_call.1} parent=35 // pred_check_branch
          %1767 = sbr.rel (%p1765) target = $region64
        $region63: #{tpu_custom_call.1} parent=35 // pred_region
          %s1768 = smul.u32 16, %s29
          %s1770 = ssub.s32 2048, 2048
          %1771 = vsyncadd %s1727, %s1770
          %s1772 = smul.addr %s1768, 2
          %s1773 = smul.addr %s1772, 64
          %s1774 = scalar_lea.hbm %s6, %s1773
          %s1775 = sshll.u32 %s1730, 4
          %s1776 = int_to_ptr.vmem [resolvable:$true] %s1775
          %1781 = dma.vmem_to_hbm [thread:$0]  %s1776, 2048, %s1774, %s1727, 128, 128, 8
        $region64: #{tpu_custom_call.1} parent=35 // pred_fallthru
          _
      $region36: #{tpu_custom_call.1} parent=5 // pred_fallthru
        _
      %p1782 = scmp.le.s32.totalorder 2, %s24
      // Predicated region
      $region65: #{tpu_custom_call.1} parent=5 // pred_check
        %p1783 = pneg %p1782
      $region66: #{tpu_custom_call.1} parent=5 // pred_check_branch
        %1785 = sbr.rel (%p1783) target = $region68
      $region67: #{tpu_custom_call.1} parent=5 // pred_region
        %s1786 = ssub.s32 %s24, 2
        // Predicated region
        $region69: #{tpu_custom_call.1} parent=67 // pred_check
          %p1787 = pneg %p142
        $region70: #{tpu_custom_call.1} parent=67 // pred_check_branch
          %1789 = sbr.rel (%p1787) target = $region72
        $region71: #{tpu_custom_call.1} parent=67 // pred_region
          %s1790 = sand.u32 %s127, 1
          %s1791 = scalar_lea.sflag [#allocation4], %s1790
          %s1792 = sand.u32 %s127, 1
          %s1793 = smul.addr %s1792, 128
          %s1794 = scalar_lea.vmem [#allocation10], %s1793
          %1795 = dma.done %s1791, 2048
        $region72: #{tpu_custom_call.1} parent=67 // pred_fallthru
          _
        // Predicated region
        $region73: #{tpu_custom_call.1} parent=67 // pred_check
          %p1796 = pneg %p168
        $region74: #{tpu_custom_call.1} parent=67 // pred_check_branch
          %1798 = sbr.rel (%p1796) target = $region76
        $region75: #{tpu_custom_call.1} parent=67 // pred_region
          %s1799 = sand.u32 %s30, 1
          %s1800 = scalar_lea.sflag [#allocation12], %s1799
          %s1801 = sand.u32 %s153, 1
          %s1802 = smul.addr %s1801, 128
          %s1803 = scalar_lea.vmem [#allocation11], %s1802
          %1804 = dma.done %s1800, 2048
        $region76: #{tpu_custom_call.1} parent=67 // pred_fallthru
          _
        // Predicated region
        $region77: #{tpu_custom_call.1} parent=67 // pred_check
          %p1805 = pneg %p194
        $region78: #{tpu_custom_call.1} parent=67 // pred_check_branch
          %1807 = sbr.rel (%p1805) target = $region80
        $region79: #{tpu_custom_call.1} parent=67 // pred_region
          %s1808 = sand.u32 %s30, 1
          %s1809 = scalar_lea.sflag [#allocation12], %s1808
          %s1810 = sand.u32 %s179, 1
          %s1811 = smul.addr %s1810, 128
          %s1812 = scalar_lea.vmem [#allocation13], %s1811
          %1813 = dma.done %s1809, 2048
        $region80: #{tpu_custom_call.1} parent=67 // pred_fallthru
          _
      $region68: #{tpu_custom_call.1} parent=5 // pred_fallthru
        _
    $region6: #{tpu_custom_call.1} parent=1 // loop_footer
      %s28 = sadd.s32 1, %s24
    $region7: #{tpu_custom_call.1} parent=1 // loop_footer_branch
      %23 = sbr.rel target = $region3
    $region8: #{tpu_custom_call.1} parent=1 // loop_exit
      _
    %1814 = vsyncpa [#allocation3], 1
    %s1815 = scalar_lea.sflag [#allocation3], 1
    %1816 = vsyncpa %s1815, 1
    %1817 = vsyncpa [#allocation6], 1
    %1818 = vsyncpa [#allocation9], 1
    %1819 = vsyncpa [#allocation4], 1
    %s1820 = scalar_lea.sflag [#allocation4], 1
    %1821 = vsyncpa %s1820, 1
    %1822 = vsyncpa [#allocation12], 1
    %s1823 = scalar_lea.sflag [#allocation12], 1
    %1824 = vsyncpa %s1823, 1

</llo_original>
